<compile_context>
chip_gen: v5e
topology: v5e:2x2
jax: 0.10.0
libtpu: 0.0.40
codegen_flags: <defaults>
</compile_context>

<pallas_src>
import functools

import jax
import jax.numpy as jnp
from jax.experimental import pallas as pl
from jax.experimental.pallas import tpu as pltpu

C1 = 20            # conv1 out channels
KH = KW = 3
_MAX_BATCH_PER_STEP = 32   # M = nb*H up to 512 per grid step


def convnet_kernel(xcat_ref, gcat_ref, ball_ref, v_ref, out_ref):
    # xcat_ref: (nb*H, 3*(W+2)) padded-input rows h,h+1,h+2 stacked along K per output row
    # gcat_ref: (3*(W+2), W*C1) conv1 weights im2col'ed over the 3 kernel rows (+ bias folded
    #                           into the always-1.0 left-pad column)
    # ball_ref: (W*C1, 3*W)     conv2 horizontal taps + 20-channel reduction, one W-block per kernel row
    # v_ref:    (nb*H, W)       conv2 bias + every tap landing on constant-1.0 padding
    # out_ref:  (nb, H, W)
    nb, H, W = out_ref.shape
    M = nb * H

    # ---- conv1 (1 -> 20 ch) + ReLU : ONE MXU contraction over K = 3*(W+2) ----
    h1 = jnp.dot(xcat_ref[...], gcat_ref[...], preferred_element_type=jnp.float32)
    h1 = jnp.maximum(h1, 0.0)                                    # (M, W*C1) f32

    # ---- conv2 (20 -> 1 ch) horizontal taps + channel reduction : ONE MXU contraction ----
    t_all = jnp.dot(h1.astype(ball_ref.dtype), ball_ref[...],
                    preferred_element_type=jnp.float32)          # (M, 3*W)
    t0 = t_all[:, 0:W]          # kernel row 0 (needs value from the row above)
    t1 = t_all[:, W:2 * W]      # kernel row 1 (same row)
    t2 = t_all[:, 2 * W:3 * W]  # kernel row 2 (needs value from the row below)

    # ---- vertical taps via XLU sublane rolls + image-boundary mask ----
    # row index within each image; boundary rows get their (constant-1.0 padding)
    # contribution from v_ref instead, so the rolled value is masked there and the
    # roll can never mix adjacent images in the folded batch.
    row = jax.lax.broadcasted_iota(jnp.int32, (M, W), 0) % H
    top = jnp.where(row == 0, 0.0, pltpu.roll(t0, shift=1, axis=0))        # t0[m-1]
    bot = jnp.where(row == H - 1, 0.0, pltpu.roll(t2, shift=M - 1, axis=0))  # t2[m+1]
    h2 = jnp.maximum(t1 + top + bot + v_ref[...], 0.0)          # (M, W) f32

    # ---- per-column softmax over each image's H rows ----
    h2 = h2.reshape(nb, H, W)
    m = jnp.max(h2, axis=1, keepdims=True)                       # (nb, 1, W)
    e = jnp.exp(h2 - m)
    s = jnp.sum(e, axis=1, keepdims=True)
    out_ref[...] = e * pl.reciprocal(s, approx=False)


def _pack_weights(w1, b1, w2, b2, H, W, compute_dtype):
    """Wrapper-side weight im2col + folding of bias / constant-1.0 padding terms."""
    f32 = jnp.float32
    w1 = w1.astype(f32)                                # (C1, 1, 3, 3)  OIHW
    b1 = b1.astype(f32)                                # (C1,)
    w2 = w2.astype(f32)                                # (1, C1, 3, 3)  OIHW
    b2 = b2.astype(f32)                                # (1,)

    w1_t = jnp.transpose(w1[:, 0], (1, 2, 0))          # (3, 3, C1)  [di, dj, c]
    w2_t = jnp.transpose(w2[0], (1, 2, 0))             # (3, 3, C1)  [di, dj, c]

    # conv1: gcat[di*(W+2)+j, w*C1+c] = w1[c, 0, di, j-w] for j-w in {0,1,2}
    j = jnp.arange(W + 2)[:, None]
    w = jnp.arange(W)[None, :]
    dj = j - w                                         # (W+2, W)
    valid = (dj >= 0) & (dj <= 2)
    g = jnp.where(valid[None, :, :, None], w1_t[:, jnp.clip(dj, 0, 2), :], 0.0)
    gcat = g.reshape(3 * (W + 2), W * C1)              # (54, W*C1)
    # conv1 bias folded into the matmul: xcat column 0 is the left-padding column,
    # i.e. constant 1.0 for every output row, so adding tiled(b1) to gcat row 0
    # contributes exactly b1[c] per output element.
    gcat = gcat.at[0, :].add(jnp.tile(b1, W))

    # conv2: ball[:, di*W + w] holds B[di, j*C1+c, w] = w2[0, c, di, j-w+1] for j-w+1 in {0,1,2}
    j2 = jnp.arange(W)[:, None]
    dj2 = j2 - w + 1                                   # (W, W)
    valid2 = (dj2 >= 0) & (dj2 <= 2)
    b4 = jnp.where(valid2[None, :, :, None], w2_t[:, jnp.clip(dj2, 0, 2), :], 0.0)
    b4 = jnp.transpose(b4, (0, 1, 3, 2)).reshape(3, W * C1, W)
    ball = jnp.concatenate([b4[0], b4[1], b4[2]], axis=1)        # (W*C1, 3W)

    # Additive correction: conv2 bias + every tap landing on constant-1.0 padding.
    s_left = jnp.sum(w2_t[:, 0, :], axis=-1)           # (3,)
    s_right = jnp.sum(w2_t[:, 2, :], axis=-1)          # (3,)
    s_row = jnp.sum(w2_t, axis=(1, 2))                 # (3,)  full padded row
    wi = jnp.arange(W)[None, :]
    cdi = (wi == 0) * s_left[:, None] + (wi == W - 1) * s_right[:, None]   # (3, W)
    hi = jnp.arange(H)[:, None]
    v = (b2[0]
         + cdi[1][None, :]
         + jnp.where(hi >= 1, cdi[0][None, :], 0.0)
         + jnp.where(hi == 0, s_row[0], 0.0)
         + jnp.where(hi <= H - 2, cdi[2][None, :], 0.0)
         + jnp.where(hi == H - 1, s_row[2], 0.0)).astype(f32)              # (H, W)

    return gcat.astype(compute_dtype), ball.astype(compute_dtype), v


@functools.partial(jax.jit, static_argnames=("grid_size", "use_bf16"))
def convnet_forward(x, w1, b1, w2, b2, *, grid_size, use_bf16=True):
    """x: (N, 1, H, W) NCHW float32.  Returns (N, grid_size, grid_size)."""
    N, C, H, W = x.shape
    assert C == 1 and H == grid_size and W == grid_size

    compute_dtype = jnp.bfloat16 if use_bf16 else jnp.float32
    gcat, ball, v = _pack_weights(w1, b1, w2, b2, H, W, compute_dtype)

    # Batch blocking: keep >= 2 grid steps when possible (both v7x TensorCores),
    # fold up to _MAX_BATCH_PER_STEP images per step into the matmul M dimension,
    # and pick nb so the padded tail is minimal.
    if N <= 1:
        num_steps, nb = max(N, 1), 1
    else:
        num_steps = min(max(2, -(-N // _MAX_BATCH_PER_STEP)), N)
        nb = -(-N // num_steps)
    n_pad = num_steps * nb

    # glue (layout plumbing): drop channel dim, pad spatially with constant 1.0
    # (F.pad(..., value=1)), pad batch to a multiple of nb, then im2col the three
    # kernel rows along K so conv1 is a single contraction per grid step.
    xp = jnp.pad(x[:, 0].astype(jnp.float32),
                 ((0, n_pad - N), (1, 1), (1, 1)), constant_values=1.0)  # (n_pad, H+2, W+2)
    xcat = jnp.concatenate([xp[:, 0:H], xp[:, 1:H + 1], xp[:, 2:H + 2]], axis=-1)
    xcat = xcat.reshape(n_pad * H, 3 * (W + 2)).astype(compute_dtype)    # (n_pad*H, 54)

    v_tiled = jnp.tile(v, (nb, 1))                                       # (nb*H, W) f32

    out = pl.pallas_call(
        convnet_kernel,
        out_shape=jax.ShapeDtypeStruct((n_pad, H, W), jnp.float32),
        grid_spec=pltpu.PrefetchScalarGridSpec(
            num_scalar_prefetch=0,
            grid=(num_steps,),
            in_specs=[
                pl.BlockSpec((nb * H, 3 * (W + 2)), lambda s: (s, 0)),
                pl.BlockSpec((3 * (W + 2), W * C1), lambda s: (0, 0)),
                pl.BlockSpec((W * C1, 3 * W), lambda s: (0, 0)),
                pl.BlockSpec((nb * H, W), lambda s: (0, 0)),
            ],
            out_specs=pl.BlockSpec((nb, H, W), lambda s: (s, 0, 0)),
        ),
        compiler_params=pltpu.CompilerParams(
            dimension_semantics=("parallel",)),
    )(xcat, gcat, ball, v_tiled)
    return out[:N]


def convnet_reference(x, w1, b1, w2, b2):
    """Pure-JAX reference mirroring the torch forward pass."""
    xp = jnp.pad(x, ((0, 0), (0, 0), (1, 1), (1, 1)), constant_values=1.0)
    h1 = jax.lax.conv_general_dilated(
        xp, w1, (1, 1), "VALID",
        dimension_numbers=("NCHW", "OIHW", "NCHW")) + b1[None, :, None, None]
    h1 = jnp.maximum(h1, 0.0)
    h1p = jnp.pad(h1, ((0, 0), (0, 0), (1, 1), (1, 1)), constant_values=1.0)
    h2 = jax.lax.conv_general_dilated(
        h1p, w2, (1, 1), "VALID",
        dimension_numbers=("NCHW", "OIHW", "NCHW")) + b2[None, :, None, None]
    h2 = jnp.maximum(h2, 0.0)[:, 0]                 # (N, H, W)
    return jax.nn.softmax(h2, axis=1)               # softmax over H per column


if __name__ == "__main__":
    grid_size = 16

    key = jax.random.PRNGKey(0)
    k_x, k_w1, k_b1, k_w2, k_b2 = jax.random.split(key, 5)

    # deterministic synthetic parameters (torch Conv2d shapes)
    w1 = jax.random.normal(k_w1, (C1, 1, KH, KW), jnp.float32) * 0.2
    b1 = jax.random.normal(k_b1, (C1,), jnp.float32) * 0.1
    w2 = jax.random.normal(k_w2, (1, C1, KH, KW), jnp.float32) * 0.2
    b2 = jax.random.normal(k_b2, (1,), jnp.float32) * 0.1

    # --- exact path (f32 MXU operands), small batch: N=2 -> 2 grid steps, nb=1 ---
    N = 2
    x = jax.random.normal(k_x, (N, 1, grid_size, grid_size), jnp.float32)
    ref = convnet_reference(x, w1, b1, w2, b2)
    out = jax.block_until_ready(
        convnet_forward(x, w1, b1, w2, b2, grid_size=grid_size, use_bf16=False))
    assert out.shape == (N, grid_size, grid_size), out.shape
    assert jnp.allclose(out, ref, atol=1e-4, rtol=1e-4), float(jnp.max(jnp.abs(out - ref)))

    # --- exact path with several images folded per grid step (exercises the
    #     batch-folded rolls / image-boundary masks): N=8 -> 2 steps, nb=4, M=64 ---
    N = 8
    x8 = jax.random.normal(k_x, (N, 1, grid_size, grid_size), jnp.float32)
    ref8 = convnet_reference(x8, w1, b1, w2, b2)
    out8 = jax.block_until_ready(
        convnet_forward(x8, w1, b1, w2, b2, grid_size=grid_size, use_bf16=False))
    assert out8.shape == (N, grid_size, grid_size), out8.shape
    assert jnp.allclose(out8, ref8, atol=1e-4, rtol=1e-4), float(jnp.max(jnp.abs(out8 - ref8)))

    # --- fast path (bf16 MXU operands, f32 accumulation/epilogue), v6e/v7x setting ---
    out8_bf16 = jax.block_until_ready(
        convnet_forward(x8, w1, b1, w2, b2, grid_size=grid_size, use_bf16=True))
    err_bf16 = float(jnp.max(jnp.abs(out8_bf16 - ref8)))
    assert err_bf16 < 5e-2, err_bf16   # softmax outputs in [0,1]; bf16-operand tolerance

    print("KERNEL_OK")
</pallas_src>

<mosaic_0001>
module attributes {stable_mosaic.version = 11 : i64} {
  func.func @convnet_kernel(%arg0: i32, %arg1: memref<16x54xf32, #tpu.memory_space<vmem>>, %arg2: memref<54x320xf32, #tpu.memory_space<vmem>>, %arg3: memref<320x48xf32, #tpu.memory_space<vmem>>, %arg4: memref<16x16xf32, #tpu.memory_space<vmem>>, %arg5: memref<1x16x16xf32, #tpu.memory_space<vmem>>) attributes {dimension_semantics = [#tpu.dimension_semantics<parallel>], iteration_bounds = array<i64: 2>, scalar_prefetch = 0 : i64, scratch_operands = 0 : i64, tpu.core_type = #tpu.core_type<tc>, window_params = [{transform_indices = @transform_0, window_bounds = array<i64: 16, 54>}, {pipeline_mode = #tpu.pipeline_mode<synchronous>, transform_indices = @transform_1, window_bounds = array<i64: 54, 320>}, {pipeline_mode = #tpu.pipeline_mode<synchronous>, transform_indices = @transform_2, window_bounds = array<i64: 320, 48>}, {pipeline_mode = #tpu.pipeline_mode<synchronous>, transform_indices = @transform_3, window_bounds = array<i64: 16, 16>}, {transform_indices = @transform_4, window_bounds = array<i64: 1, 16, 16>}]} {
    %c0 = arith.constant 0 : index
    %c0_0 = arith.constant 0 : index
    %0 = vector.load %arg1[%c0, %c0_0] : memref<16x54xf32, #tpu.memory_space<vmem>>, vector<16x54xf32>
    %c0_1 = arith.constant 0 : index
    %c0_2 = arith.constant 0 : index
    %1 = vector.load %arg2[%c0_1, %c0_2] : memref<54x320xf32, #tpu.memory_space<vmem>>, vector<54x320xf32>
    %cst = arith.constant dense<0.000000e+00> : vector<16x320xf32>
    %2 = tpu.matmul %0, %1, %cst {dimension_numbers = #tpu.dot_dimension_numbers<[1], [0], [0], [1], [0, 0, 1, 1], [], []>} : vector<16x54xf32>, vector<54x320xf32>, vector<16x320xf32> -> vector<16x320xf32>
    %cst_3 = arith.constant 0.000000e+00 : f32
    %3 = vector.broadcast %cst_3 : f32 to vector<16x320xf32>
    %4 = arith.maximumf %2, %3 : vector<16x320xf32>
    %c0_4 = arith.constant 0 : index
    %c0_5 = arith.constant 0 : index
    %5 = vector.load %arg3[%c0_4, %c0_5] : memref<320x48xf32, #tpu.memory_space<vmem>>, vector<320x48xf32>
    %cst_6 = arith.constant dense<0.000000e+00> : vector<16x48xf32>
    %6 = tpu.matmul %4, %5, %cst_6 {dimension_numbers = #tpu.dot_dimension_numbers<[1], [0], [0], [1], [0, 0, 1, 1], [], []>} : vector<16x320xf32>, vector<320x48xf32>, vector<16x48xf32> -> vector<16x48xf32>
    %7 = vector.extract_strided_slice %6 {offsets = [0, 0], sizes = [16, 16], strides = [1, 1]} : vector<16x48xf32> to vector<16x16xf32>
    %8 = vector.extract_strided_slice %6 {offsets = [0, 16], sizes = [16, 16], strides = [1, 1]} : vector<16x48xf32> to vector<16x16xf32>
    %9 = vector.extract_strided_slice %6 {offsets = [0, 32], sizes = [16, 16], strides = [1, 1]} : vector<16x48xf32> to vector<16x16xf32>
    %10 = tpu.iota {dimensions = array<i32: 0>} : vector<16x16xi32>
    %c16_i32 = arith.constant 16 : i32
    %c0_i32 = arith.constant 0 : i32
    %11 = arith.cmpi eq, %c16_i32, %c0_i32 : i32
    %c1_i32 = arith.constant 1 : i32
    %12 = arith.select %11, %c1_i32, %c16_i32 : i32
    %13 = vector.broadcast %12 : i32 to vector<16x16xi32>
    %14 = arith.remsi %10, %13 : vector<16x16xi32>
    %c0_i32_7 = arith.constant 0 : i32
    %15 = vector.broadcast %c0_i32_7 : i32 to vector<16x16xi32>
    %16 = arith.cmpi ne, %14, %15 : vector<16x16xi32>
    %c0_i32_8 = arith.constant 0 : i32
    %17 = vector.broadcast %c0_i32_8 : i32 to vector<16x16xi32>
    %18 = arith.cmpi slt, %14, %17 : vector<16x16xi32>
    %c0_i32_9 = arith.constant 0 : i32
    %19 = arith.cmpi slt, %12, %c0_i32_9 : i32
    %20 = vector.broadcast %19 : i1 to vector<16x16xi1>
    %21 = vector.broadcast %20 : vector<16x16xi1> to vector<16x16xi1>
    %22 = arith.xori %18, %21 : vector<16x16xi1>
    %23 = arith.andi %22, %16 : vector<16x16xi1>
    %24 = vector.broadcast %12 : i32 to vector<16x16xi32>
    %25 = arith.addi %14, %24 : vector<16x16xi32>
    %26 = arith.select %23, %25, %14 : vector<16x16xi1>, vector<16x16xi32>
    %c0_i32_10 = arith.constant 0 : i32
    %27 = vector.broadcast %c0_i32_10 : i32 to vector<16x16xi32>
    %28 = arith.cmpi eq, %26, %27 : vector<16x16xi32>
    %c1_i32_11 = arith.constant 1 : i32
    %29 = tpu.dynamic_rotate %7 by %c1_i32_11 dim 0 : vector<16x16xf32>, i32 -> vector<16x16xf32>
    %cst_12 = arith.constant 0.000000e+00 : f32
    %30 = vector.broadcast %cst_12 : f32 to vector<16x16xf32>
    %31 = arith.select %28, %30, %29 : vector<16x16xi1>, vector<16x16xf32>
    %c15_i32 = arith.constant 15 : i32
    %32 = vector.broadcast %c15_i32 : i32 to vector<16x16xi32>
    %33 = arith.cmpi eq, %26, %32 : vector<16x16xi32>
    %c15_i32_13 = arith.constant 15 : i32
    %34 = tpu.dynamic_rotate %9 by %c15_i32_13 dim 0 : vector<16x16xf32>, i32 -> vector<16x16xf32>
    %cst_14 = arith.constant 0.000000e+00 : f32
    %35 = vector.broadcast %cst_14 : f32 to vector<16x16xf32>
    %36 = arith.select %33, %35, %34 : vector<16x16xi1>, vector<16x16xf32>
    %37 = arith.addf %8, %31 : vector<16x16xf32>
    %38 = arith.addf %37, %36 : vector<16x16xf32>
    %c0_15 = arith.constant 0 : index
    %c0_16 = arith.constant 0 : index
    %39 = vector.load %arg4[%c0_15, %c0_16] : memref<16x16xf32, #tpu.memory_space<vmem>>, vector<16x16xf32>
    %40 = arith.addf %38, %39 : vector<16x16xf32>
    %cst_17 = arith.constant 0.000000e+00 : f32
    %41 = vector.broadcast %cst_17 : f32 to vector<16x16xf32>
    %42 = arith.maximumf %40, %41 : vector<16x16xf32>
    %43 = vector.shape_cast %42 : vector<16x16xf32> to vector<1x16x16xf32>
    %cst_18 = arith.constant dense<0xFF800000> : vector<1x16xf32>
    %44 = vector.multi_reduction <maximumf>, %43, %cst_18 [1] : vector<1x16x16xf32> to vector<1x16xf32>
    %45 = vector.shape_cast %44 : vector<1x16xf32> to vector<1x1x16xf32>
    %46 = vector.broadcast %45 : vector<1x1x16xf32> to vector<1x16x16xf32>
    %47 = arith.subf %43, %46 : vector<1x16x16xf32>
    %48 = math.exp %47 : vector<1x16x16xf32>
    %cst_19 = arith.constant dense<0.000000e+00> : vector<1x16xf32>
    %49 = vector.multi_reduction <add>, %48, %cst_19 [1] : vector<1x16x16xf32> to vector<1x16xf32>
    %50 = vector.shape_cast %49 : vector<1x16xf32> to vector<1x1x16xf32>
    %51 = tpu.reciprocal %50 : vector<1x1x16xf32> -> vector<1x1x16xf32>
    %52 = vector.broadcast %51 : vector<1x1x16xf32> to vector<1x16x16xf32>
    %53 = arith.mulf %48, %52 : vector<1x16x16xf32>
    %c0_20 = arith.constant 0 : index
    %c0_21 = arith.constant 0 : index
    %c0_22 = arith.constant 0 : index
    %54 = vector.load %arg5[%c0_20, %c0_21, %c0_22] : memref<1x16x16xf32, #tpu.memory_space<vmem>>, vector<1x16x16xf32>
    tpu.vector_store %arg5[%c0_20, %c0_21, %c0_22], %53 {strides = array<i32>} : memref<1x16x16xf32, #tpu.memory_space<vmem>>, vector<1x16x16xf32>,
    return
  }
  func.func @transform_0(%arg0: i32) -> (i32, i32) {
    %c0_i32 = arith.constant 0 : i32
    %c0_i32_0 = arith.constant 0 : i32
    return %arg0, %c0_i32 : i32, i32
  }
  func.func @transform_1(%arg0: i32) -> (i32, i32) {
    %c0_i32 = arith.constant 0 : i32
    %c0_i32_0 = arith.constant 0 : i32
    %c0_i32_1 = arith.constant 0 : i32
    return %c0_i32, %c0_i32_0 : i32, i32
  }
  func.func @transform_2(%arg0: i32) -> (i32, i32) {
    %c0_i32 = arith.constant 0 : i32
    %c0_i32_0 = arith.constant 0 : i32
    %c0_i32_1 = arith.constant 0 : i32
    return %c0_i32, %c0_i32_0 : i32, i32
  }
  func.func @transform_3(%arg0: i32) -> (i32, i32) {
    %c0_i32 = arith.constant 0 : i32
    %c0_i32_0 = arith.constant 0 : i32
    %c0_i32_1 = arith.constant 0 : i32
    return %c0_i32, %c0_i32_0 : i32, i32
  }
  func.func @transform_4(%arg0: i32) -> (i32, i32, i32) {
    %c0_i32 = arith.constant 0 : i32
    %c0_i32_0 = arith.constant 0 : i32
    %c0_i32_1 = arith.constant 0 : i32
    return %arg0, %c0_i32, %c0_i32_0 : i32, i32, i32
  }
}

</mosaic_0001>

<llo_original>
// kernel: tile.8
$region0: #{tile.8}
  #allocation0 [shape = 's32[1]{0}', space=sflag, size = 0x4, scoped, tag = 'scoped memory for tile.8']
  %s0 = inlined_call_operand.vmem [shape: f32[20], index: 0, kind: input, shape index: {}]
  %s1 = inlined_call_operand.vmem [shape: f32[16,20], index: 1, kind: output, shape index: {}]
  // Predicated region
  $region2: #{tile.8} parent=0 // pred_check
    _
  $region3: #{tile.8} parent=0 // pred_check_branch
    %3 = sbr.rel (0) target = $region5
  $region4: #{tile.8} parent=0 // pred_region
    _
  $region5: #{tile.8} parent=0 // pred_fallthru
    _
  %v4 = vld [vmem:[%s0] ss:$0 sm:$0xff]
  %5 = vst [vmem:[%s1] sm:$0xff] %v4
  %s6 = scalar_lea.vmem %s1, 8
  %7 = vst [vmem:[%s6] sm:$0xff] %v4

// kernel: squeeze.13
$region0: #{squeeze.13}
  %s0 = inlined_call_operand.vmem [shape: f32[1,16,20,16], index: 0, kind: input, shape index: {}]
  %s1 = inlined_call_operand.vmem [shape: f32[320,16], index: 1, kind: output, shape index: {}]
  %s2 = smov 3
  %v3 = vld [vmem:[%s0] ss:$16 sm:%s2]
  %s4 = smov 12
  %v5 = vld [vmem:[%s0] ss:$16 sm:%s4]
  %vm6 = vcmask 1043458
  %v7 = vsel %vm6, %v5, %v3
  %s8 = smov 48
  %v9 = vld [vmem:[%s0] ss:$16 sm:%s8]
  %vm10 = vcmask 1045508
  %v11 = vsel %vm10, %v9, %v7
  %s12 = smov 192
  %v13 = vld [vmem:[%s0] ss:$16 sm:%s12]
  %vm14 = vcmask 1047558
  %v15 = vsel %vm14, %v13, %v11
  %vm16 = vcmask 162816
  %17 = vst.msk [vmem:[%s1] sm:$0xff] %vm16, %v15
  %s18 = scalar_lea.vmem %s0, 128
  %s19 = smov 3
  %v20 = vld [vmem:[%s18] ss:$16 sm:%s19]
  %s21 = scalar_lea.vmem %s0, 128
  %s22 = smov 12
  %v23 = vld [vmem:[%s21] ss:$16 sm:%s22]
  %vm24 = vcmask 1043458
  %v25 = vsel %vm24, %v23, %v20
  %s26 = scalar_lea.vmem %s0, 128
  %s27 = smov 48
  %v28 = vld [vmem:[%s26] ss:$16 sm:%s27]
  %vm29 = vcmask 1045508
  %v30 = vsel %vm29, %v28, %v25
  %s31 = scalar_lea.vmem %s0, 128
  %s32 = smov 192
  %v33 = vld [vmem:[%s31] ss:$16 sm:%s32]
  %vm34 = vcmask 1047558
  %v35 = vsel %vm34, %v33, %v30
  %vm36 = vcmask 162816
  %s37 = scalar_lea.vmem %s1, 24
  %38 = vst.msk [vmem:[%s37] sm:$0xff] %vm36, %v35
  %s39 = scalar_lea.vmem %s0, 134
  %s40 = smov 3
  %v41 = vld [vmem:[%s39] ss:$16 sm:%s40]
  %s42 = scalar_lea.vmem %s0, 134
  %s43 = smov 12
  %v44 = vld [vmem:[%s42] ss:$16 sm:%s43]
  %vm45 = vcmask 1043458
  %v46 = vsel %vm45, %v44, %v41
  %s47 = scalar_lea.vmem %s0, 134
  %s48 = smov 48
  %v49 = vld [vmem:[%s47] ss:$16 sm:%s48]
  %vm50 = vcmask 1045508
  %v51 = vsel %vm50, %v49, %v46
  %s52 = scalar_lea.vmem %s0, 134
  %s53 = smov 192
  %v54 = vld [vmem:[%s52] ss:$16 sm:%s53]
  %vm55 = vcmask 1047558
  %v56 = vsel %vm55, %v54, %v51
  %s57 = scalar_lea.vmem %s0, 6
  %s58 = smov 3
  %v59 = vld [vmem:[%s57] ss:$16 sm:%s58]
  %s60 = scalar_lea.vmem %s0, 6
  %s61 = smov 12
  %v62 = vld [vmem:[%s60] ss:$16 sm:%s61]
  %vm63 = vcmask 1043458
  %v64 = vsel %vm63, %v62, %v59
  %s65 = scalar_lea.vmem %s0, 6
  %s66 = smov 48
  %v67 = vld [vmem:[%s65] ss:$16 sm:%s66]
  %vm68 = vcmask 1045508
  %v69 = vsel %vm68, %v67, %v64
  %s70 = scalar_lea.vmem %s0, 6
  %s71 = smov 192
  %v72 = vld [vmem:[%s70] ss:$16 sm:%s71]
  %vm73 = vcmask 1047558
  %v74 = vsel %vm73, %v72, %v69
  %vm75 = vcmask 64512
  %v76 = vsel %vm75, %v74, %v56
  %77 = vrot.lane.b32.xlu0 %v76, 120
  %v78 = vpop.permute.xlu0 %77
  %vm79 = vcmask 97280
  %s80 = scalar_lea.vmem %s1, 32
  %81 = vst.msk [vmem:[%s80] sm:$0xff] %vm79, %v78
  %vm82 = vcmask 1048512
  %83 = vst.msk [vmem:[%s1] sm:$0xff] %vm82, %v78
  %s84 = scalar_lea.vmem %s0, 6
  %s85 = smov 3
  %v86 = vld [vmem:[%s84] ss:$16 sm:%s85]
  %s87 = scalar_lea.vmem %s0, 6
  %s88 = smov 12
  %v89 = vld [vmem:[%s87] ss:$16 sm:%s88]
  %vm90 = vcmask 1043458
  %v91 = vsel %vm90, %v89, %v86
  %s92 = scalar_lea.vmem %s0, 6
  %s93 = smov 48
  %v94 = vld [vmem:[%s92] ss:$16 sm:%s93]
  %vm95 = vcmask 1045508
  %v96 = vsel %vm95, %v94, %v91
  %s97 = scalar_lea.vmem %s0, 6
  %s98 = smov 192
  %v99 = vld [vmem:[%s97] ss:$16 sm:%s98]
  %vm100 = vcmask 1047558
  %v101 = vsel %vm100, %v99, %v96
  %s102 = scalar_lea.vmem %s0, 134
  %s103 = smov 3
  %v104 = vld [vmem:[%s102] ss:$16 sm:%s103]
  %s105 = scalar_lea.vmem %s0, 134
  %s106 = smov 12
  %v107 = vld [vmem:[%s105] ss:$16 sm:%s106]
  %vm108 = vcmask 1043458
  %v109 = vsel %vm108, %v107, %v104
  %s110 = scalar_lea.vmem %s0, 134
  %s111 = smov 48
  %v112 = vld [vmem:[%s110] ss:$16 sm:%s111]
  %vm113 = vcmask 1045508
  %v114 = vsel %vm113, %v112, %v109
  %s115 = scalar_lea.vmem %s0, 134
  %s116 = smov 192
  %v117 = vld [vmem:[%s115] ss:$16 sm:%s116]
  %vm118 = vcmask 1047558
  %v119 = vsel %vm118, %v117, %v114
  %vm120 = vcmask 64512
  %v121 = vsel %vm120, %v119, %v101
  %122 = vrot.lane.b32.xlu0 %v121, 120
  %v123 = vpop.permute.xlu0 %122
  %vm124 = vcmask 97280
  %s125 = scalar_lea.vmem %s1, 8
  %126 = vst.msk [vmem:[%s125] sm:$0xff] %vm124, %v123
  %vm127 = vcmask 1048512
  %s128 = scalar_lea.vmem %s1, 24
  %129 = vst.msk [vmem:[%s128] sm:$0xff] %vm127, %v123
  %s130 = scalar_lea.vmem %s0, 140
  %s131 = smov 3
  %v132 = vld [vmem:[%s130] ss:$16 sm:%s131]
  %s133 = scalar_lea.vmem %s0, 140
  %s134 = smov 12
  %v135 = vld [vmem:[%s133] ss:$16 sm:%s134]
  %vm136 = vcmask 1043458
  %v137 = vsel %vm136, %v135, %v132
  %s138 = scalar_lea.vmem %s0, 140
  %s139 = smov 48
  %v140 = vld [vmem:[%s138] ss:$16 sm:%s139]
  %vm141 = vcmask 1045508
  %v142 = vsel %vm141, %v140, %v137
  %s143 = scalar_lea.vmem %s0, 140
  %s144 = smov 192
  %v145 = vld [vmem:[%s143] ss:$16 sm:%s144]
  %vm146 = vcmask 1047558
  %v147 = vsel %vm146, %v145, %v142
  %s148 = scalar_lea.vmem %s0, 140
  %s149 = smov 3
  %v150 = vld [vmem:[%s148] ss:$16 sm:%s149]
  %s151 = scalar_lea.vmem %s0, 140
  %s152 = smov 12
  %v153 = vld [vmem:[%s151] ss:$16 sm:%s152]
  %vm154 = vcmask 1043458
  %v155 = vsel %vm154, %v153, %v150
  %s156 = scalar_lea.vmem %s0, 140
  %s157 = smov 48
  %v158 = vld [vmem:[%s156] ss:$16 sm:%s157]
  %vm159 = vcmask 1045508
  %v160 = vsel %vm159, %v158, %v155
  %s161 = scalar_lea.vmem %s0, 140
  %s162 = smov 192
  %v163 = vld [vmem:[%s161] ss:$16 sm:%s162]
  %vm164 = vcmask 1047558
  %v165 = vsel %vm164, %v163, %v160
  %vm166 = vcmask 130048
  %v167 = vsel %vm166, %v165, %v147
  %168 = vrot.lane.b32.xlu0 %v167, 112
  %v169 = vpop.permute.xlu0 %168
  %vm170 = vcmask 31744
  %s171 = scalar_lea.vmem %s1, 40
  %172 = vst.msk [vmem:[%s171] sm:$0xff] %vm170, %v169
  %vm173 = vcmask 1048448
  %s174 = scalar_lea.vmem %s1, 32
  %175 = vst.msk [vmem:[%s174] sm:$0xff] %vm173, %v169
  %s176 = scalar_lea.vmem %s0, 12
  %s177 = smov 3
  %v178 = vld [vmem:[%s176] ss:$16 sm:%s177]
  %s179 = scalar_lea.vmem %s0, 12
  %s180 = smov 12
  %v181 = vld [vmem:[%s179] ss:$16 sm:%s180]
  %vm182 = vcmask 1043458
  %v183 = vsel %vm182, %v181, %v178
  %s184 = scalar_lea.vmem %s0, 12
  %s185 = smov 48
  %v186 = vld [vmem:[%s184] ss:$16 sm:%s185]
  %vm187 = vcmask 1045508
  %v188 = vsel %vm187, %v186, %v183
  %s189 = scalar_lea.vmem %s0, 12
  %s190 = smov 192
  %v191 = vld [vmem:[%s189] ss:$16 sm:%s190]
  %vm192 = vcmask 1047558
  %v193 = vsel %vm192, %v191, %v188
  %s194 = scalar_lea.vmem %s0, 12
  %s195 = smov 3
  %v196 = vld [vmem:[%s194] ss:$16 sm:%s195]
  %s197 = scalar_lea.vmem %s0, 12
  %s198 = smov 12
  %v199 = vld [vmem:[%s197] ss:$16 sm:%s198]
  %vm200 = vcmask 1043458
  %v201 = vsel %vm200, %v199, %v196
  %s202 = scalar_lea.vmem %s0, 12
  %s203 = smov 48
  %v204 = vld [vmem:[%s202] ss:$16 sm:%s203]
  %vm205 = vcmask 1045508
  %v206 = vsel %vm205, %v204, %v201
  %s207 = scalar_lea.vmem %s0, 12
  %s208 = smov 192
  %v209 = vld [vmem:[%s207] ss:$16 sm:%s208]
  %vm210 = vcmask 1047558
  %v211 = vsel %vm210, %v209, %v206
  %vm212 = vcmask 130048
  %v213 = vsel %vm212, %v211, %v193
  %214 = vrot.lane.b32.xlu0 %v213, 112
  %v215 = vpop.permute.xlu0 %214
  %vm216 = vcmask 31744
  %s217 = scalar_lea.vmem %s1, 16
  %218 = vst.msk [vmem:[%s217] sm:$0xff] %vm216, %v215
  %vm219 = vcmask 1048448
  %s220 = scalar_lea.vmem %s1, 8
  %221 = vst.msk [vmem:[%s220] sm:$0xff] %vm219, %v215
  %s222 = scalar_lea.vmem %s0, 5
  %s223 = smov 3
  %v224 = vld [vmem:[%s222] ss:$16 sm:%s223]
  %s225 = scalar_lea.vmem %s0, 5
  %s226 = smov 12
  %v227 = vld [vmem:[%s225] ss:$16 sm:%s226]
  %vm228 = vcmask 1043458
  %v229 = vsel %vm228, %v227, %v224
  %s230 = scalar_lea.vmem %s0, 5
  %s231 = smov 48
  %v232 = vld [vmem:[%s230] ss:$16 sm:%s231]
  %vm233 = vcmask 1045508
  %v234 = vsel %vm233, %v232, %v229
  %s235 = scalar_lea.vmem %s0, 5
  %s236 = smov 192
  %v237 = vld [vmem:[%s235] ss:$16 sm:%s236]
  %vm238 = vcmask 1047558
  %v239 = vsel %vm238, %v237, %v234
  %240 = vrot.lane.b32.xlu0 %v239, 100
  %v241 = vpop.permute.xlu0 %240
  %vm242 = vcmask 982816
  %243 = vst.msk [vmem:[%s1] sm:$0xff] %vm242, %v241
  %s244 = scalar_lea.vmem %s0, 133
  %s245 = smov 3
  %v246 = vld [vmem:[%s244] ss:$16 sm:%s245]
  %s247 = scalar_lea.vmem %s0, 133
  %s248 = smov 12
  %v249 = vld [vmem:[%s247] ss:$16 sm:%s248]
  %vm250 = vcmask 1043458
  %v251 = vsel %vm250, %v249, %v246
  %s252 = scalar_lea.vmem %s0, 133
  %s253 = smov 48
  %v254 = vld [vmem:[%s252] ss:$16 sm:%s253]
  %vm255 = vcmask 1045508
  %v256 = vsel %vm255, %v254, %v251
  %s257 = scalar_lea.vmem %s0, 133
  %s258 = smov 192
  %v259 = vld [vmem:[%s257] ss:$16 sm:%s258]
  %vm260 = vcmask 1047558
  %v261 = vsel %vm260, %v259, %v256
  %262 = vrot.lane.b32.xlu0 %v261, 100
  %v263 = vpop.permute.xlu0 %262
  %vm264 = vcmask 982816
  %s265 = scalar_lea.vmem %s1, 24
  %266 = vst.msk [vmem:[%s265] sm:$0xff] %vm264, %v263
  %s267 = scalar_lea.vmem %s0, 139
  %s268 = smov 3
  %v269 = vld [vmem:[%s267] ss:$16 sm:%s268]
  %s270 = scalar_lea.vmem %s0, 139
  %s271 = smov 12
  %v272 = vld [vmem:[%s270] ss:$16 sm:%s271]
  %vm273 = vcmask 1043458
  %v274 = vsel %vm273, %v272, %v269
  %s275 = scalar_lea.vmem %s0, 139
  %s276 = smov 48
  %v277 = vld [vmem:[%s275] ss:$16 sm:%s276]
  %vm278 = vcmask 1045508
  %v279 = vsel %vm278, %v277, %v274
  %s280 = scalar_lea.vmem %s0, 139
  %s281 = smov 192
  %v282 = vld [vmem:[%s280] ss:$16 sm:%s281]
  %vm283 = vcmask 1047558
  %v284 = vsel %vm283, %v282, %v279
  %285 = vrot.lane.b32.xlu0 %v284, 92
  %v286 = vpop.permute.xlu0 %285
  %vm287 = vcmask 917216
  %s288 = scalar_lea.vmem %s1, 32
  %289 = vst.msk [vmem:[%s288] sm:$0xff] %vm287, %v286
  %s290 = scalar_lea.vmem %s0, 11
  %s291 = smov 3
  %v292 = vld [vmem:[%s290] ss:$16 sm:%s291]
  %s293 = scalar_lea.vmem %s0, 11
  %s294 = smov 12
  %v295 = vld [vmem:[%s293] ss:$16 sm:%s294]
  %vm296 = vcmask 1043458
  %v297 = vsel %vm296, %v295, %v292
  %s298 = scalar_lea.vmem %s0, 11
  %s299 = smov 48
  %v300 = vld [vmem:[%s298] ss:$16 sm:%s299]
  %vm301 = vcmask 1045508
  %v302 = vsel %vm301, %v300, %v297
  %s303 = scalar_lea.vmem %s0, 11
  %s304 = smov 192
  %v305 = vld [vmem:[%s303] ss:$16 sm:%s304]
  %vm306 = vcmask 1047558
  %v307 = vsel %vm306, %v305, %v302
  %308 = vrot.lane.b32.xlu0 %v307, 92
  %v309 = vpop.permute.xlu0 %308
  %vm310 = vcmask 917216
  %s311 = scalar_lea.vmem %s1, 8
  %312 = vst.msk [vmem:[%s311] sm:$0xff] %vm310, %v309
  %s313 = scalar_lea.vmem %s0, 4
  %s314 = smov 3
  %v315 = vld [vmem:[%s313] ss:$16 sm:%s314]
  %s316 = scalar_lea.vmem %s0, 4
  %s317 = smov 12
  %v318 = vld [vmem:[%s316] ss:$16 sm:%s317]
  %vm319 = vcmask 1043458
  %v320 = vsel %vm319, %v318, %v315
  %s321 = scalar_lea.vmem %s0, 4
  %s322 = smov 48
  %v323 = vld [vmem:[%s321] ss:$16 sm:%s322]
  %vm324 = vcmask 1045508
  %v325 = vsel %vm324, %v323, %v320
  %s326 = scalar_lea.vmem %s0, 4
  %s327 = smov 192
  %v328 = vld [vmem:[%s326] ss:$16 sm:%s327]
  %vm329 = vcmask 1047558
  %v330 = vsel %vm329, %v328, %v325
  %331 = vrot.lane.b32.xlu0 %v330, 80
  %v332 = vpop.permute.xlu0 %331
  %vm333 = vcmask 818816
  %334 = vst.msk [vmem:[%s1] sm:$0xff] %vm333, %v332
  %s335 = scalar_lea.vmem %s0, 132
  %s336 = smov 3
  %v337 = vld [vmem:[%s335] ss:$16 sm:%s336]
  %s338 = scalar_lea.vmem %s0, 132
  %s339 = smov 12
  %v340 = vld [vmem:[%s338] ss:$16 sm:%s339]
  %vm341 = vcmask 1043458
  %v342 = vsel %vm341, %v340, %v337
  %s343 = scalar_lea.vmem %s0, 132
  %s344 = smov 48
  %v345 = vld [vmem:[%s343] ss:$16 sm:%s344]
  %vm346 = vcmask 1045508
  %v347 = vsel %vm346, %v345, %v342
  %s348 = scalar_lea.vmem %s0, 132
  %s349 = smov 192
  %v350 = vld [vmem:[%s348] ss:$16 sm:%s349]
  %vm351 = vcmask 1047558
  %v352 = vsel %vm351, %v350, %v347
  %353 = vrot.lane.b32.xlu0 %v352, 80
  %v354 = vpop.permute.xlu0 %353
  %vm355 = vcmask 818816
  %s356 = scalar_lea.vmem %s1, 24
  %357 = vst.msk [vmem:[%s356] sm:$0xff] %vm355, %v354
  %s358 = scalar_lea.vmem %s0, 138
  %s359 = smov 3
  %v360 = vld [vmem:[%s358] ss:$16 sm:%s359]
  %s361 = scalar_lea.vmem %s0, 138
  %s362 = smov 12
  %v363 = vld [vmem:[%s361] ss:$16 sm:%s362]
  %vm364 = vcmask 1043458
  %v365 = vsel %vm364, %v363, %v360
  %s366 = scalar_lea.vmem %s0, 138
  %s367 = smov 48
  %v368 = vld [vmem:[%s366] ss:$16 sm:%s367]
  %vm369 = vcmask 1045508
  %v370 = vsel %vm369, %v368, %v365
  %s371 = scalar_lea.vmem %s0, 138
  %s372 = smov 192
  %v373 = vld [vmem:[%s371] ss:$16 sm:%s372]
  %vm374 = vcmask 1047558
  %v375 = vsel %vm374, %v373, %v370
  %376 = vrot.lane.b32.xlu0 %v375, 72
  %v377 = vpop.permute.xlu0 %376
  %vm378 = vcmask 753216
  %s379 = scalar_lea.vmem %s1, 32
  %380 = vst.msk [vmem:[%s379] sm:$0xff] %vm378, %v377
  %s381 = scalar_lea.vmem %s0, 10
  %s382 = smov 3
  %v383 = vld [vmem:[%s381] ss:$16 sm:%s382]
  %s384 = scalar_lea.vmem %s0, 10
  %s385 = smov 12
  %v386 = vld [vmem:[%s384] ss:$16 sm:%s385]
  %vm387 = vcmask 1043458
  %v388 = vsel %vm387, %v386, %v383
  %s389 = scalar_lea.vmem %s0, 10
  %s390 = smov 48
  %v391 = vld [vmem:[%s389] ss:$16 sm:%s390]
  %vm392 = vcmask 1045508
  %v393 = vsel %vm392, %v391, %v388
  %s394 = scalar_lea.vmem %s0, 10
  %s395 = smov 192
  %v396 = vld [vmem:[%s394] ss:$16 sm:%s395]
  %vm397 = vcmask 1047558
  %v398 = vsel %vm397, %v396, %v393
  %399 = vrot.lane.b32.xlu0 %v398, 72
  %v400 = vpop.permute.xlu0 %399
  %vm401 = vcmask 753216
  %s402 = scalar_lea.vmem %s1, 8
  %403 = vst.msk [vmem:[%s402] sm:$0xff] %vm401, %v400
  %s404 = scalar_lea.vmem %s0, 3
  %s405 = smov 3
  %v406 = vld [vmem:[%s404] ss:$16 sm:%s405]
  %s407 = scalar_lea.vmem %s0, 3
  %s408 = smov 12
  %v409 = vld [vmem:[%s407] ss:$16 sm:%s408]
  %vm410 = vcmask 1043458
  %v411 = vsel %vm410, %v409, %v406
  %s412 = scalar_lea.vmem %s0, 3
  %s413 = smov 48
  %v414 = vld [vmem:[%s412] ss:$16 sm:%s413]
  %vm415 = vcmask 1045508
  %v416 = vsel %vm415, %v414, %v411
  %s417 = scalar_lea.vmem %s0, 3
  %s418 = smov 192
  %v419 = vld [vmem:[%s417] ss:$16 sm:%s418]
  %vm420 = vcmask 1047558
  %v421 = vsel %vm420, %v419, %v416
  %422 = vrot.lane.b32.xlu0 %v421, 60
  %v423 = vpop.permute.xlu0 %422
  %vm424 = vcmask 654816
  %425 = vst.msk [vmem:[%s1] sm:$0xff] %vm424, %v423
  %s426 = scalar_lea.vmem %s0, 131
  %s427 = smov 3
  %v428 = vld [vmem:[%s426] ss:$16 sm:%s427]
  %s429 = scalar_lea.vmem %s0, 131
  %s430 = smov 12
  %v431 = vld [vmem:[%s429] ss:$16 sm:%s430]
  %vm432 = vcmask 1043458
  %v433 = vsel %vm432, %v431, %v428
  %s434 = scalar_lea.vmem %s0, 131
  %s435 = smov 48
  %v436 = vld [vmem:[%s434] ss:$16 sm:%s435]
  %vm437 = vcmask 1045508
  %v438 = vsel %vm437, %v436, %v433
  %s439 = scalar_lea.vmem %s0, 131
  %s440 = smov 192
  %v441 = vld [vmem:[%s439] ss:$16 sm:%s440]
  %vm442 = vcmask 1047558
  %v443 = vsel %vm442, %v441, %v438
  %444 = vrot.lane.b32.xlu0 %v443, 60
  %v445 = vpop.permute.xlu0 %444
  %vm446 = vcmask 654816
  %s447 = scalar_lea.vmem %s1, 24
  %448 = vst.msk [vmem:[%s447] sm:$0xff] %vm446, %v445
  %s449 = scalar_lea.vmem %s0, 137
  %s450 = smov 3
  %v451 = vld [vmem:[%s449] ss:$16 sm:%s450]
  %s452 = scalar_lea.vmem %s0, 137
  %s453 = smov 12
  %v454 = vld [vmem:[%s452] ss:$16 sm:%s453]
  %vm455 = vcmask 1043458
  %v456 = vsel %vm455, %v454, %v451
  %s457 = scalar_lea.vmem %s0, 137
  %s458 = smov 48
  %v459 = vld [vmem:[%s457] ss:$16 sm:%s458]
  %vm460 = vcmask 1045508
  %v461 = vsel %vm460, %v459, %v456
  %s462 = scalar_lea.vmem %s0, 137
  %s463 = smov 192
  %v464 = vld [vmem:[%s462] ss:$16 sm:%s463]
  %vm465 = vcmask 1047558
  %v466 = vsel %vm465, %v464, %v461
  %467 = vrot.lane.b32.xlu0 %v466, 52
  %v468 = vpop.permute.xlu0 %467
  %vm469 = vcmask 589216
  %s470 = scalar_lea.vmem %s1, 32
  %471 = vst.msk [vmem:[%s470] sm:$0xff] %vm469, %v468
  %s472 = scalar_lea.vmem %s0, 9
  %s473 = smov 3
  %v474 = vld [vmem:[%s472] ss:$16 sm:%s473]
  %s475 = scalar_lea.vmem %s0, 9
  %s476 = smov 12
  %v477 = vld [vmem:[%s475] ss:$16 sm:%s476]
  %vm478 = vcmask 1043458
  %v479 = vsel %vm478, %v477, %v474
  %s480 = scalar_lea.vmem %s0, 9
  %s481 = smov 48
  %v482 = vld [vmem:[%s480] ss:$16 sm:%s481]
  %vm483 = vcmask 1045508
  %v484 = vsel %vm483, %v482, %v479
  %s485 = scalar_lea.vmem %s0, 9
  %s486 = smov 192
  %v487 = vld [vmem:[%s485] ss:$16 sm:%s486]
  %vm488 = vcmask 1047558
  %v489 = vsel %vm488, %v487, %v484
  %490 = vrot.lane.b32.xlu0 %v489, 52
  %v491 = vpop.permute.xlu0 %490
  %vm492 = vcmask 589216
  %s493 = scalar_lea.vmem %s1, 8
  %494 = vst.msk [vmem:[%s493] sm:$0xff] %vm492, %v491
  %s495 = scalar_lea.vmem %s0, 143
  %s496 = smov 3
  %v497 = vld [vmem:[%s495] ss:$16 sm:%s496]
  %s498 = scalar_lea.vmem %s0, 143
  %s499 = smov 12
  %v500 = vld [vmem:[%s498] ss:$16 sm:%s499]
  %vm501 = vcmask 1043458
  %v502 = vsel %vm501, %v500, %v497
  %s503 = scalar_lea.vmem %s0, 143
  %s504 = smov 48
  %v505 = vld [vmem:[%s503] ss:$16 sm:%s504]
  %vm506 = vcmask 1045508
  %v507 = vsel %vm506, %v505, %v502
  %s508 = scalar_lea.vmem %s0, 143
  %s509 = smov 192
  %v510 = vld [vmem:[%s508] ss:$16 sm:%s509]
  %vm511 = vcmask 1047558
  %v512 = vsel %vm511, %v510, %v507
  %513 = vrot.lane.b32.xlu0 %v512, 44
  %v514 = vpop.permute.xlu0 %513
  %vm515 = vcmask 523616
  %s516 = scalar_lea.vmem %s1, 40
  %517 = vst.msk [vmem:[%s516] sm:$0xff] %vm515, %v514
  %s518 = scalar_lea.vmem %s0, 15
  %s519 = smov 3
  %v520 = vld [vmem:[%s518] ss:$16 sm:%s519]
  %s521 = scalar_lea.vmem %s0, 15
  %s522 = smov 12
  %v523 = vld [vmem:[%s521] ss:$16 sm:%s522]
  %vm524 = vcmask 1043458
  %v525 = vsel %vm524, %v523, %v520
  %s526 = scalar_lea.vmem %s0, 15
  %s527 = smov 48
  %v528 = vld [vmem:[%s526] ss:$16 sm:%s527]
  %vm529 = vcmask 1045508
  %v530 = vsel %vm529, %v528, %v525
  %s531 = scalar_lea.vmem %s0, 15
  %s532 = smov 192
  %v533 = vld [vmem:[%s531] ss:$16 sm:%s532]
  %vm534 = vcmask 1047558
  %v535 = vsel %vm534, %v533, %v530
  %536 = vrot.lane.b32.xlu0 %v535, 44
  %v537 = vpop.permute.xlu0 %536
  %vm538 = vcmask 523616
  %s539 = scalar_lea.vmem %s1, 16
  %540 = vst.msk [vmem:[%s539] sm:$0xff] %vm538, %v537
  %s541 = scalar_lea.vmem %s0, 2
  %s542 = smov 3
  %v543 = vld [vmem:[%s541] ss:$16 sm:%s542]
  %s544 = scalar_lea.vmem %s0, 2
  %s545 = smov 12
  %v546 = vld [vmem:[%s544] ss:$16 sm:%s545]
  %vm547 = vcmask 1043458
  %v548 = vsel %vm547, %v546, %v543
  %s549 = scalar_lea.vmem %s0, 2
  %s550 = smov 48
  %v551 = vld [vmem:[%s549] ss:$16 sm:%s550]
  %vm552 = vcmask 1045508
  %v553 = vsel %vm552, %v551, %v548
  %s554 = scalar_lea.vmem %s0, 2
  %s555 = smov 192
  %v556 = vld [vmem:[%s554] ss:$16 sm:%s555]
  %vm557 = vcmask 1047558
  %v558 = vsel %vm557, %v556, %v553
  %559 = vrot.lane.b32.xlu0 %v558, 40
  %v560 = vpop.permute.xlu0 %559
  %vm561 = vcmask 490816
  %562 = vst.msk [vmem:[%s1] sm:$0xff] %vm561, %v560
  %s563 = scalar_lea.vmem %s0, 130
  %s564 = smov 3
  %v565 = vld [vmem:[%s563] ss:$16 sm:%s564]
  %s566 = scalar_lea.vmem %s0, 130
  %s567 = smov 12
  %v568 = vld [vmem:[%s566] ss:$16 sm:%s567]
  %vm569 = vcmask 1043458
  %v570 = vsel %vm569, %v568, %v565
  %s571 = scalar_lea.vmem %s0, 130
  %s572 = smov 48
  %v573 = vld [vmem:[%s571] ss:$16 sm:%s572]
  %vm574 = vcmask 1045508
  %v575 = vsel %vm574, %v573, %v570
  %s576 = scalar_lea.vmem %s0, 130
  %s577 = smov 192
  %v578 = vld [vmem:[%s576] ss:$16 sm:%s577]
  %vm579 = vcmask 1047558
  %v580 = vsel %vm579, %v578, %v575
  %581 = vrot.lane.b32.xlu0 %v580, 40
  %v582 = vpop.permute.xlu0 %581
  %vm583 = vcmask 490816
  %s584 = scalar_lea.vmem %s1, 24
  %585 = vst.msk [vmem:[%s584] sm:$0xff] %vm583, %v582
  %s586 = scalar_lea.vmem %s0, 136
  %s587 = smov 3
  %v588 = vld [vmem:[%s586] ss:$16 sm:%s587]
  %s589 = scalar_lea.vmem %s0, 136
  %s590 = smov 12
  %v591 = vld [vmem:[%s589] ss:$16 sm:%s590]
  %vm592 = vcmask 1043458
  %v593 = vsel %vm592, %v591, %v588
  %s594 = scalar_lea.vmem %s0, 136
  %s595 = smov 48
  %v596 = vld [vmem:[%s594] ss:$16 sm:%s595]
  %vm597 = vcmask 1045508
  %v598 = vsel %vm597, %v596, %v593
  %s599 = scalar_lea.vmem %s0, 136
  %s600 = smov 192
  %v601 = vld [vmem:[%s599] ss:$16 sm:%s600]
  %vm602 = vcmask 1047558
  %v603 = vsel %vm602, %v601, %v598
  %604 = vrot.lane.b32.xlu0 %v603, 32
  %v605 = vpop.permute.xlu0 %604
  %vm606 = vcmask 425216
  %s607 = scalar_lea.vmem %s1, 32
  %608 = vst.msk [vmem:[%s607] sm:$0xff] %vm606, %v605
  %s609 = scalar_lea.vmem %s0, 8
  %s610 = smov 3
  %v611 = vld [vmem:[%s609] ss:$16 sm:%s610]
  %s612 = scalar_lea.vmem %s0, 8
  %s613 = smov 12
  %v614 = vld [vmem:[%s612] ss:$16 sm:%s613]
  %vm615 = vcmask 1043458
  %v616 = vsel %vm615, %v614, %v611
  %s617 = scalar_lea.vmem %s0, 8
  %s618 = smov 48
  %v619 = vld [vmem:[%s617] ss:$16 sm:%s618]
  %vm620 = vcmask 1045508
  %v621 = vsel %vm620, %v619, %v616
  %s622 = scalar_lea.vmem %s0, 8
  %s623 = smov 192
  %v624 = vld [vmem:[%s622] ss:$16 sm:%s623]
  %vm625 = vcmask 1047558
  %v626 = vsel %vm625, %v624, %v621
  %627 = vrot.lane.b32.xlu0 %v626, 32
  %v628 = vpop.permute.xlu0 %627
  %vm629 = vcmask 425216
  %s630 = scalar_lea.vmem %s1, 8
  %631 = vst.msk [vmem:[%s630] sm:$0xff] %vm629, %v628
  %s632 = scalar_lea.vmem %s0, 142
  %s633 = smov 3
  %v634 = vld [vmem:[%s632] ss:$16 sm:%s633]
  %s635 = scalar_lea.vmem %s0, 142
  %s636 = smov 12
  %v637 = vld [vmem:[%s635] ss:$16 sm:%s636]
  %vm638 = vcmask 1043458
  %v639 = vsel %vm638, %v637, %v634
  %s640 = scalar_lea.vmem %s0, 142
  %s641 = smov 48
  %v642 = vld [vmem:[%s640] ss:$16 sm:%s641]
  %vm643 = vcmask 1045508
  %v644 = vsel %vm643, %v642, %v639
  %s645 = scalar_lea.vmem %s0, 142
  %s646 = smov 192
  %v647 = vld [vmem:[%s645] ss:$16 sm:%s646]
  %vm648 = vcmask 1047558
  %v649 = vsel %vm648, %v647, %v644
  %650 = vrot.lane.b32.xlu0 %v649, 24
  %v651 = vpop.permute.xlu0 %650
  %vm652 = vcmask 359616
  %s653 = scalar_lea.vmem %s1, 40
  %654 = vst.msk [vmem:[%s653] sm:$0xff] %vm652, %v651
  %s655 = scalar_lea.vmem %s0, 14
  %s656 = smov 3
  %v657 = vld [vmem:[%s655] ss:$16 sm:%s656]
  %s658 = scalar_lea.vmem %s0, 14
  %s659 = smov 12
  %v660 = vld [vmem:[%s658] ss:$16 sm:%s659]
  %vm661 = vcmask 1043458
  %v662 = vsel %vm661, %v660, %v657
  %s663 = scalar_lea.vmem %s0, 14
  %s664 = smov 48
  %v665 = vld [vmem:[%s663] ss:$16 sm:%s664]
  %vm666 = vcmask 1045508
  %v667 = vsel %vm666, %v665, %v662
  %s668 = scalar_lea.vmem %s0, 14
  %s669 = smov 192
  %v670 = vld [vmem:[%s668] ss:$16 sm:%s669]
  %vm671 = vcmask 1047558
  %v672 = vsel %vm671, %v670, %v667
  %673 = vrot.lane.b32.xlu0 %v672, 24
  %v674 = vpop.permute.xlu0 %673
  %vm675 = vcmask 359616
  %s676 = scalar_lea.vmem %s1, 16
  %677 = vst.msk [vmem:[%s676] sm:$0xff] %vm675, %v674
  %s678 = scalar_lea.vmem %s0, 1
  %s679 = smov 3
  %v680 = vld [vmem:[%s678] ss:$16 sm:%s679]
  %s681 = scalar_lea.vmem %s0, 1
  %s682 = smov 12
  %v683 = vld [vmem:[%s681] ss:$16 sm:%s682]
  %vm684 = vcmask 1043458
  %v685 = vsel %vm684, %v683, %v680
  %s686 = scalar_lea.vmem %s0, 1
  %s687 = smov 48
  %v688 = vld [vmem:[%s686] ss:$16 sm:%s687]
  %vm689 = vcmask 1045508
  %v690 = vsel %vm689, %v688, %v685
  %s691 = scalar_lea.vmem %s0, 1
  %s692 = smov 192
  %v693 = vld [vmem:[%s691] ss:$16 sm:%s692]
  %vm694 = vcmask 1047558
  %v695 = vsel %vm694, %v693, %v690
  %696 = vrot.lane.b32.xlu0 %v695, 20
  %v697 = vpop.permute.xlu0 %696
  %vm698 = vcmask 326816
  %699 = vst.msk [vmem:[%s1] sm:$0xff] %vm698, %v697
  %s700 = scalar_lea.vmem %s0, 129
  %s701 = smov 3
  %v702 = vld [vmem:[%s700] ss:$16 sm:%s701]
  %s703 = scalar_lea.vmem %s0, 129
  %s704 = smov 12
  %v705 = vld [vmem:[%s703] ss:$16 sm:%s704]
  %vm706 = vcmask 1043458
  %v707 = vsel %vm706, %v705, %v702
  %s708 = scalar_lea.vmem %s0, 129
  %s709 = smov 48
  %v710 = vld [vmem:[%s708] ss:$16 sm:%s709]
  %vm711 = vcmask 1045508
  %v712 = vsel %vm711, %v710, %v707
  %s713 = scalar_lea.vmem %s0, 129
  %s714 = smov 192
  %v715 = vld [vmem:[%s713] ss:$16 sm:%s714]
  %vm716 = vcmask 1047558
  %v717 = vsel %vm716, %v715, %v712
  %718 = vrot.lane.b32.xlu0 %v717, 20
  %v719 = vpop.permute.xlu0 %718
  %vm720 = vcmask 326816
  %s721 = scalar_lea.vmem %s1, 24
  %722 = vst.msk [vmem:[%s721] sm:$0xff] %vm720, %v719
  %s723 = scalar_lea.vmem %s0, 135
  %s724 = smov 3
  %v725 = vld [vmem:[%s723] ss:$16 sm:%s724]
  %s726 = scalar_lea.vmem %s0, 135
  %s727 = smov 12
  %v728 = vld [vmem:[%s726] ss:$16 sm:%s727]
  %vm729 = vcmask 1043458
  %v730 = vsel %vm729, %v728, %v725
  %s731 = scalar_lea.vmem %s0, 135
  %s732 = smov 48
  %v733 = vld [vmem:[%s731] ss:$16 sm:%s732]
  %vm734 = vcmask 1045508
  %v735 = vsel %vm734, %v733, %v730
  %s736 = scalar_lea.vmem %s0, 135
  %s737 = smov 192
  %v738 = vld [vmem:[%s736] ss:$16 sm:%s737]
  %vm739 = vcmask 1047558
  %v740 = vsel %vm739, %v738, %v735
  %741 = vrot.lane.b32.xlu0 %v740, 12
  %v742 = vpop.permute.xlu0 %741
  %vm743 = vcmask 261216
  %s744 = scalar_lea.vmem %s1, 32
  %745 = vst.msk [vmem:[%s744] sm:$0xff] %vm743, %v742
  %s746 = scalar_lea.vmem %s0, 7
  %s747 = smov 3
  %v748 = vld [vmem:[%s746] ss:$16 sm:%s747]
  %s749 = scalar_lea.vmem %s0, 7
  %s750 = smov 12
  %v751 = vld [vmem:[%s749] ss:$16 sm:%s750]
  %vm752 = vcmask 1043458
  %v753 = vsel %vm752, %v751, %v748
  %s754 = scalar_lea.vmem %s0, 7
  %s755 = smov 48
  %v756 = vld [vmem:[%s754] ss:$16 sm:%s755]
  %vm757 = vcmask 1045508
  %v758 = vsel %vm757, %v756, %v753
  %s759 = scalar_lea.vmem %s0, 7
  %s760 = smov 192
  %v761 = vld [vmem:[%s759] ss:$16 sm:%s760]
  %vm762 = vcmask 1047558
  %v763 = vsel %vm762, %v761, %v758
  %764 = vrot.lane.b32.xlu0 %v763, 12
  %v765 = vpop.permute.xlu0 %764
  %vm766 = vcmask 261216
  %s767 = scalar_lea.vmem %s1, 8
  %768 = vst.msk [vmem:[%s767] sm:$0xff] %vm766, %v765
  %s769 = scalar_lea.vmem %s0, 141
  %s770 = smov 3
  %v771 = vld [vmem:[%s769] ss:$16 sm:%s770]
  %s772 = scalar_lea.vmem %s0, 141
  %s773 = smov 12
  %v774 = vld [vmem:[%s772] ss:$16 sm:%s773]
  %vm775 = vcmask 1043458
  %v776 = vsel %vm775, %v774, %v771
  %s777 = scalar_lea.vmem %s0, 141
  %s778 = smov 48
  %v779 = vld [vmem:[%s777] ss:$16 sm:%s778]
  %vm780 = vcmask 1045508
  %v781 = vsel %vm780, %v779, %v776
  %s782 = scalar_lea.vmem %s0, 141
  %s783 = smov 192
  %v784 = vld [vmem:[%s782] ss:$16 sm:%s783]
  %vm785 = vcmask 1047558
  %v786 = vsel %vm785, %v784, %v781
  %787 = vrot.lane.b32.xlu0 %v786, 4
  %v788 = vpop.permute.xlu0 %787
  %vm789 = vcmask 195616
  %s790 = scalar_lea.vmem %s1, 40
  %791 = vst.msk [vmem:[%s790] sm:$0xff] %vm789, %v788
  %s792 = scalar_lea.vmem %s0, 13
  %s793 = smov 3
  %v794 = vld [vmem:[%s792] ss:$16 sm:%s793]
  %s795 = scalar_lea.vmem %s0, 13
  %s796 = smov 12
  %v797 = vld [vmem:[%s795] ss:$16 sm:%s796]
  %vm798 = vcmask 1043458
  %v799 = vsel %vm798, %v797, %v794
  %s800 = scalar_lea.vmem %s0, 13
  %s801 = smov 48
  %v802 = vld [vmem:[%s800] ss:$16 sm:%s801]
  %vm803 = vcmask 1045508
  %v804 = vsel %vm803, %v802, %v799
  %s805 = scalar_lea.vmem %s0, 13
  %s806 = smov 192
  %v807 = vld [vmem:[%s805] ss:$16 sm:%s806]
  %vm808 = vcmask 1047558
  %v809 = vsel %vm808, %v807, %v804
  %810 = vrot.lane.b32.xlu0 %v809, 4
  %v811 = vpop.permute.xlu0 %810
  %vm812 = vcmask 195616
  %s813 = scalar_lea.vmem %s1, 16
  %814 = vst.msk [vmem:[%s813] sm:$0xff] %vm812, %v811

// kernel: convnet_forward.1
$region0: #{convnet_forward.1}
  #allocation0 [shape = 'u32[]', space=smem, size = 0x4, offset = 0x4, fixed_abs, tag = 'smem constant byte address 0x4 - core index']
  #allocation1 [shape = 'u32[72,128]{1,0:T(1,128)}', space=vmem, size = 0x9000, scoped, tag = 'internal scratch']
  %s0 = inlined_call_operand.vmem [shape: f32[32,54], index: 0, kind: input, shape index: {}]
  %s1 = inlined_call_operand.vmem [shape: f32[54,320], index: 1, kind: input, shape index: {}]
  %s2 = inlined_call_operand.vmem [shape: f32[320,48], index: 2, kind: input, shape index: {}]
  %s3 = inlined_call_operand.vmem [shape: f32[16,16], index: 3, kind: input, shape index: {}]
  %s4 = inlined_call_operand.hbm [shape: f32[2,16,16], index: 4, kind: output, shape index: {}]
  %s5 = sld [smem:[#allocation0]]
  $region49: #{convnet_forward.1} parent=0
    _
  %s7 = ssub.s32 1, %s5
  %s8 = scalar_select 0, %s7, %s5
  $region1: #{convnet_forward.1} parent=0
    #allocation2 [shape = 'u8[16384]{0}', space=vmem, size = 0x4000, scoped, tag = 'output window, operand 0']
    #allocation3 [shape = 's32[2]{0}', space=sflag, size = 0x8, scoped, tag = 'scoped memory for convnet_forward.1']
    %9 = vsyncpa [#allocation3], 0
    %s10 = scalar_lea.sflag [#allocation3], 1
    %11 = vsyncpa %s10, 0
    loop: start=0, step=1, limit=4
    $region2: #{convnet_forward.1} parent=1 // loop_pre_header
      _
    $region3: #{convnet_forward.1} parent=1 // loop_header
      %s13 = sphi 0, %s17
      %p14 = scmp.ge.s32.totalorder %s13, 4
      %s23 = sphi 0, %s25
      %s26 = sphi 0, %s23
      %s27 = sphi 0, %s26
      %s43 = sphi 0, %s27
      %s47 = sphi 0, %s47
      %s49 = sphi 0, %s47
      %s50 = sphi 0, %s49
      %s64 = sphi 0, %s50
      %s68 = sphi 0, %s68
      %s70 = sphi 0, %s68
      %s71 = sphi 0, %s70
      %s85 = sphi 0, %s71
      %s89 = sphi 0, %s89
      %s91 = sphi 0, %s89
      %s92 = sphi 0, %s91
      %s106 = sphi 0, %s92
      %s112 = sphi 0, %s114
      %s115 = sphi 0, %s112
      %s116 = sphi 0, %s115
      %s132 = sphi 0, %s116
    $region4: #{convnet_forward.1} parent=1 // loop_header_branch
      %16 = sbr.rel (%p14) target = $region8
    $region5: #{convnet_forward.1} parent=1 // loop_body
      %s18 = ssub.s32 %s13, 1
      %s19 = ssub.s32 %s13, 2
      %s20 = sadd.s32 %s13, 1
      %s21 = ssub.s32 %s13, %s20
      %p22 = scmp.eq.s32.totalorder %s21, 0
      %s24 = sadd.s32 %s23, 1
      %s25 = scalar_select %p22, %s23, %s24
      %p28 = pneg %p22
      %p29 = scmp.eq.s32.totalorder %s13, 1
      %p30 = por %p28, %p29
      %p31 = scmp.ne.s32.totalorder %s23, %s26
      %p32 = scmp.eq.s32.totalorder %s13, 0
      %p33 = por %p31, %p32
      %p34 = scmp.ne.s32.totalorder %s23, %s26
      %p35 = scmp.eq.s32.totalorder %s18, 1
      %p36 = por %p34, %p35
      %p37 = scmp.ne.s32.totalorder %s26, %s27
      %p38 = scmp.eq.s32.totalorder %s18, 0
      %p39 = por %p37, %p38
      %p40 = scmp.ne.s32.totalorder %s26, %s27
      %p41 = scmp.eq.s32.totalorder %s19, 1
      %p42 = por %p40, %p41
      %p44 = scmp.ne.s32.totalorder %s27, %s43
      %p45 = scmp.eq.s32.totalorder %s19, 0
      %p46 = por %p44, %p45
      %s48 = sadd.s32 %s47, 1
      %p51 = scmp.eq.s32.totalorder %s13, 1
      %p52 = scmp.ne.s32.totalorder %s47, %s49
      %p53 = scmp.eq.s32.totalorder %s13, 0
      %p54 = por %p52, %p53
      %p55 = scmp.ne.s32.totalorder %s47, %s49
      %p56 = scmp.eq.s32.totalorder %s18, 1
      %p57 = por %p55, %p56
      %p58 = scmp.ne.s32.totalorder %s49, %s50
      %p59 = scmp.eq.s32.totalorder %s18, 0
      %p60 = por %p58, %p59
      %p61 = scmp.ne.s32.totalorder %s49, %s50
      %p62 = scmp.eq.s32.totalorder %s19, 1
      %p63 = por %p61, %p62
      %p65 = scmp.ne.s32.totalorder %s50, %s64
      %p66 = scmp.eq.s32.totalorder %s19, 0
      %p67 = por %p65, %p66
      %s69 = sadd.s32 %s68, 1
      %p72 = scmp.eq.s32.totalorder %s13, 1
      %p73 = scmp.ne.s32.totalorder %s68, %s70
      %p74 = scmp.eq.s32.totalorder %s13, 0
      %p75 = por %p73, %p74
      %p76 = scmp.ne.s32.totalorder %s68, %s70
      %p77 = scmp.eq.s32.totalorder %s18, 1
      %p78 = por %p76, %p77
      %p79 = scmp.ne.s32.totalorder %s70, %s71
      %p80 = scmp.eq.s32.totalorder %s18, 0
      %p81 = por %p79, %p80
      %p82 = scmp.ne.s32.totalorder %s70, %s71
      %p83 = scmp.eq.s32.totalorder %s19, 1
      %p84 = por %p82, %p83
      %p86 = scmp.ne.s32.totalorder %s71, %s85
      %p87 = scmp.eq.s32.totalorder %s19, 0
      %p88 = por %p86, %p87
      %s90 = sadd.s32 %s89, 1
      %p93 = scmp.eq.s32.totalorder %s13, 1
      %p94 = scmp.ne.s32.totalorder %s89, %s91
      %p95 = scmp.eq.s32.totalorder %s13, 0
      %p96 = por %p94, %p95
      %p97 = scmp.ne.s32.totalorder %s89, %s91
      %p98 = scmp.eq.s32.totalorder %s18, 1
      %p99 = por %p97, %p98
      %p100 = scmp.ne.s32.totalorder %s91, %s92
      %p101 = scmp.eq.s32.totalorder %s18, 0
      %p102 = por %p100, %p101
      %p103 = scmp.ne.s32.totalorder %s91, %s92
      %p104 = scmp.eq.s32.totalorder %s19, 1
      %p105 = por %p103, %p104
      %p107 = scmp.ne.s32.totalorder %s92, %s106
      %p108 = scmp.eq.s32.totalorder %s19, 0
      %p109 = por %p107, %p108
      %s110 = ssub.s32 %s13, %s20
      %p111 = scmp.eq.s32.totalorder %s110, 0
      %s113 = sadd.s32 %s112, 1
      %s114 = scalar_select %p111, %s112, %s113
      %p117 = pneg %p111
      %p118 = scmp.eq.s32.totalorder %s13, 1
      %p119 = por %p117, %p118
      %p120 = scmp.ne.s32.totalorder %s112, %s115
      %p121 = scmp.eq.s32.totalorder %s13, 0
      %p122 = por %p120, %p121
      %p123 = scmp.ne.s32.totalorder %s112, %s115
      %p124 = scmp.eq.s32.totalorder %s18, 1
      %p125 = por %p123, %p124
      %p126 = scmp.ne.s32.totalorder %s115, %s116
      %p127 = scmp.eq.s32.totalorder %s18, 0
      %p128 = por %p126, %p127
      %p129 = scmp.ne.s32.totalorder %s115, %s116
      %p130 = scmp.eq.s32.totalorder %s19, 1
      %p131 = por %p129, %p130
      %p133 = scmp.ne.s32.totalorder %s116, %s132
      %p134 = scmp.eq.s32.totalorder %s19, 0
      %p135 = por %p133, %p134
      %p136 = scmp.le.s32.totalorder 1, %s13
      %p137 = scmp.lt.s32.totalorder %s13, 3
      %p138 = pnand %p136, %p137
      %p139 = pneg %p138
      // Predicated region
      $region9: #{convnet_forward.1} parent=5 // pred_check
        _
      $region10: #{convnet_forward.1} parent=5 // pred_check_branch
        %141 = sbr.rel (%p138) target = $region12
      $region11: #{convnet_forward.1} parent=5 // pred_region
        %s142 = ssub.s32 %s13, 1
        // Predicated region
        $region13: #{convnet_forward.1} parent=11 // pred_check
          %p143 = pneg %p60
        $region14: #{convnet_forward.1} parent=11 // pred_check_branch
          %145 = sbr.rel (%p143) target = $region16
        $region15: #{convnet_forward.1} parent=11 // pred_region
          _
        $region16: #{convnet_forward.1} parent=11 // pred_fallthru
          _
        // Predicated region
        $region17: #{convnet_forward.1} parent=11 // pred_check
          %p146 = pneg %p81
        $region18: #{convnet_forward.1} parent=11 // pred_check_branch
          %148 = sbr.rel (%p146) target = $region20
        $region19: #{convnet_forward.1} parent=11 // pred_region
          _
        $region20: #{convnet_forward.1} parent=11 // pred_fallthru
          _
        // Predicated region
        $region21: #{convnet_forward.1} parent=11 // pred_check
          %p149 = pneg %p102
        $region22: #{convnet_forward.1} parent=11 // pred_check_branch
          %151 = sbr.rel (%p149) target = $region24
        $region23: #{convnet_forward.1} parent=11 // pred_region
          _
        $region24: #{convnet_forward.1} parent=11 // pred_fallthru
          _
      $region12: #{convnet_forward.1} parent=5 // pred_fallthru
        _
      %p152 = scmp.lt.s32.totalorder %s13, 2
      // Predicated region
      $region25: #{convnet_forward.1} parent=5 // pred_check
        %p153 = pneg %p152
      $region26: #{convnet_forward.1} parent=5 // pred_check_branch
        %155 = sbr.rel (%p153) target = $region28
      $region27: #{convnet_forward.1} parent=5 // pred_region
        // Predicated region
        $region29: #{convnet_forward.1} parent=27 // pred_check
          %p156 = pneg %p33
        $region30: #{convnet_forward.1} parent=27 // pred_check_branch
          %158 = sbr.rel (%p156) target = $region32
        $region31: #{convnet_forward.1} parent=27 // pred_region
          %s159 = smul.u32 2, %s13
          %p160 = scmp.lt.s32.totalorder %s159, 3
          %s161 = scalar_select %p160, %s159, 3
          %s162 = smul.addr %s161, 8
          %s163 = scalar_lea.vmem %s0, %s162
          %s164 = smul.u32 2, %s13
        $region32: #{convnet_forward.1} parent=27 // pred_fallthru
          _
      $region28: #{convnet_forward.1} parent=5 // pred_fallthru
        _
      %p165 = scmp.le.s32.totalorder 1, %s13
      %p166 = scmp.lt.s32.totalorder %s13, 3
      %p167 = pnand %p165, %p166
      %p168 = pneg %p167
      // Predicated region
      $region33: #{convnet_forward.1} parent=5 // pred_check
        _
      $region34: #{convnet_forward.1} parent=5 // pred_check_branch
        %170 = sbr.rel (%p167) target = $region36
      $region35: #{convnet_forward.1} parent=5 // pred_region
        %s171 = ssub.s32 %s13, 1
        %s172 = smul.u32 2, %s18
        %p173 = scmp.lt.s32.totalorder %s172, 3
        %s174 = scalar_select %p173, %s172, 3
        %s175 = smul.addr %s174, 8
        %s176 = scalar_lea.vmem %s0, %s175
        %p177 = pneg %p39
        %p178 = pneg %p36
        %p179 = pneg %p60
        %p180 = pneg %p57
        %p181 = pneg %p81
        %p182 = pneg %p78
        %p183 = pneg %p102
        %p184 = pneg %p99
        %p185 = pneg %p128
        %p186 = pneg %p125
        %s187 = sand.u32 %s115, 1
        %s188 = scalar_lea.sflag [#allocation3], %s187
        %s189 = sand.u32 %s115, 1
        %s190 = smul.addr %s189, 16
        %s191 = scalar_lea.vmem [#allocation2], %s190
        %s192 = smul.u32 2, %s18
        %p193 = scmp.lt.s32.totalorder %s192, 3
        %s194 = scalar_select %p193, %s192, 3
        %s195 = smul.addr %s194, 8
        %s196 = scalar_lea.vmem %s0, %s195
        %s197 = smul.u32 2, %s18
        %v198 = vld [vmem:[%s196] sm:$0xff]
        %v199 = vld [vmem:[%s196 + $0x8] sm:$0xff]
        %v200 = vld [vmem:[%s1] sm:$0xff]
        %v201 = vld [vmem:[%s1 + $0x8] sm:$0xff]
        %v202 = vld [vmem:[%s1 + $0x10] sm:$0xff]
        %v203 = vld [vmem:[%s1 + $0x18] sm:$0xff]
        %v204 = vld [vmem:[%s1 + $0x20] sm:$0xff]
        %v205 = vld [vmem:[%s1 + $0x28] sm:$0xff]
        %v206 = vld [vmem:[%s1 + $0x30] sm:$0xff]
        %v207 = vld [vmem:[%s1 + $0x38] sm:$0xff]
        %v208 = vld [vmem:[%s1 + $0x40] sm:$0xff]
        %v209 = vld [vmem:[%s1 + $0x48] sm:$0xff]
        %v210 = vld [vmem:[%s1 + $0x50] sm:$0xff]
        %v211 = vld [vmem:[%s1 + $0x58] sm:$0xff]
        %v212 = vld [vmem:[%s1 + $0x60] sm:$0xff]
        %v213 = vld [vmem:[%s1 + $0x68] sm:$0xff]
        %v214 = vld [vmem:[%s1 + $0x70] sm:$0xff]
        %v215 = vld [vmem:[%s1 + $0x78] sm:$0xff]
        %v216 = vld [vmem:[%s1 + $0x80] sm:$0xff]
        %v217 = vld [vmem:[%s1 + $0x88] sm:$0xff]
        %v218 = vld [vmem:[%s1 + $0x90] sm:$0x3f]
        %v219 = vld [vmem:[%s1 + $0x98] sm:$0x3f]
        %v220 = vld [vmem:[%s1 + $0xa0] sm:$0x3f]
        %vm221 = vcmask 441344
        %v223 = vsel %vm221, %v198, 0
        %v226 = vsel %vm221, %v199, 0
        %vm228 = vcmask 1045504
        %v230 = vsel %vm228, %v218, 0
        %v233 = vsel %vm228, %v219, 0
        %v236 = vsel %vm228, %v220, 0
        %238 = vmatpush.msra.mxu0 0.0
        %239 = vmatpush.msra.mxu0 0.0
        %240 = vmatpush.msra.mxu0 0.0
        %241 = vmatpush.msra.mxu0 0.0
        %242 = vmatpush.msra.mxu0 0.0
        %243 = vmatpush.msra.mxu0 0.0
        %244 = vmatpush.msra.mxu0 0.0
        %245 = vmatpush.msra.mxu0 0.0
        %246 = vmatpush.msra.mxu0 0.0
        %247 = vmatpush.msra.mxu0 %v230
        %248 = vmatpush.msra.mxu0 %v215
        %249 = vmatpush.msra.mxu0 %v212
        %250 = vmatpush.msra.mxu0 %v209
        %251 = vmatpush.msra.mxu0 %v206
        %252 = vmatpush.msra.mxu0 %v203
        %253 = vmatpush.msra.mxu0 %v200
        %254 = vmatmul.f32.gmra.mxu0 %v223
        %v255 = vpop.f32.mrf.mxu0
        %v256 = vadd.f32 0.0, %v255
        %257 = vmatmul.f32.gmra.mxu0 %v226
        %v258 = vpop.f32.mrf.mxu0
        %v259 = vadd.f32 0.0, %v258
        %260 = vdwg.mxu0
        %261 = vmatpush.msra.mxu0 0.0
        %262 = vmatpush.msra.mxu0 0.0
        %263 = vmatpush.msra.mxu0 0.0
        %264 = vmatpush.msra.mxu0 0.0
        %265 = vmatpush.msra.mxu0 0.0
        %266 = vmatpush.msra.mxu0 0.0
        %267 = vmatpush.msra.mxu0 0.0
        %268 = vmatpush.msra.mxu0 0.0
        %269 = vmatpush.msra.mxu0 0.0
        %270 = vmatpush.msra.mxu0 %v233
        %271 = vmatpush.msra.mxu0 %v216
        %272 = vmatpush.msra.mxu0 %v213
        %273 = vmatpush.msra.mxu0 %v210
        %274 = vmatpush.msra.mxu0 %v207
        %275 = vmatpush.msra.mxu0 %v204
        %276 = vmatpush.msra.mxu0 %v201
        %277 = vmatmul.f32.gmra.mxu0 %v223
        %v278 = vpop.f32.mrf.mxu0
        %v279 = vadd.f32 0.0, %v278
        %280 = vmatmul.f32.gmra.mxu0 %v226
        %v281 = vpop.f32.mrf.mxu0
        %v282 = vadd.f32 0.0, %v281
        %283 = vdwg.mxu0
        %284 = vmatpush.msra.mxu0 0.0
        %285 = vmatpush.msra.mxu0 0.0
        %286 = vmatpush.msra.mxu0 0.0
        %287 = vmatpush.msra.mxu0 0.0
        %288 = vmatpush.msra.mxu0 0.0
        %289 = vmatpush.msra.mxu0 0.0
        %290 = vmatpush.msra.mxu0 0.0
        %291 = vmatpush.msra.mxu0 0.0
        %292 = vmatpush.msra.mxu0 0.0
        %293 = vmatpush.msra.mxu0 %v236
        %294 = vmatpush.msra.mxu0 %v217
        %295 = vmatpush.msra.mxu0 %v214
        %296 = vmatpush.msra.mxu0 %v211
        %297 = vmatpush.msra.mxu0 %v208
        %298 = vmatpush.msra.mxu0 %v205
        %299 = vmatpush.msra.mxu0 %v202
        %300 = vmatmul.f32.gmra.mxu0 %v223
        %v301 = vpop.f32.mrf.mxu0
        %v302 = vadd.f32 0.0, %v301
        %303 = vmatmul.f32.gmra.mxu0 %v226
        %v304 = vpop.f32.mrf.mxu0
        %v305 = vadd.f32 0.0, %v304
        %306 = vdwg.mxu0
        %v307 = vmax.f32 %v256, 0.0
        %v308 = vmax.f32 %v279, 0.0
        %v309 = vmax.f32 %v302, 0.0
        %v310 = vmax.f32 %v259, 0.0
        %v311 = vmax.f32 %v282, 0.0
        %v312 = vmax.f32 %v305, 0.0
        %v313 = vld [vmem:[%s2] sm:$0xff]
        %v314 = vld [vmem:[%s2 + $0x8] sm:$0xff]
        %v315 = vld [vmem:[%s2 + $0x10] sm:$0xff]
        %v316 = vld [vmem:[%s2 + $0x18] sm:$0xff]
        %v317 = vld [vmem:[%s2 + $0x20] sm:$0xff]
        %v318 = vld [vmem:[%s2 + $0x28] sm:$0xff]
        %v319 = vld [vmem:[%s2 + $0x30] sm:$0xff]
        %v320 = vld [vmem:[%s2 + $0x38] sm:$0xff]
        %v321 = vld [vmem:[%s2 + $0x40] sm:$0xff]
        %v322 = vld [vmem:[%s2 + $0x48] sm:$0xff]
        %v323 = vld [vmem:[%s2 + $0x50] sm:$0xff]
        %v324 = vld [vmem:[%s2 + $0x58] sm:$0xff]
        %v325 = vld [vmem:[%s2 + $0x60] sm:$0xff]
        %v326 = vld [vmem:[%s2 + $0x68] sm:$0xff]
        %v327 = vld [vmem:[%s2 + $0x70] sm:$0xff]
        %v328 = vld [vmem:[%s2 + $0x78] sm:$0xff]
        %v329 = vld [vmem:[%s2 + $0x80] sm:$0xff]
        %v330 = vld [vmem:[%s2 + $0x88] sm:$0xff]
        %v331 = vld [vmem:[%s2 + $0x90] sm:$0xff]
        %v332 = vld [vmem:[%s2 + $0x98] sm:$0xff]
        %v333 = vld [vmem:[%s2 + $0xa0] sm:$0xff]
        %v334 = vld [vmem:[%s2 + $0xa8] sm:$0xff]
        %v335 = vld [vmem:[%s2 + $0xb0] sm:$0xff]
        %v336 = vld [vmem:[%s2 + $0xb8] sm:$0xff]
        %v337 = vld [vmem:[%s2 + $0xc0] sm:$0xff]
        %v338 = vld [vmem:[%s2 + $0xc8] sm:$0xff]
        %v339 = vld [vmem:[%s2 + $0xd0] sm:$0xff]
        %v340 = vld [vmem:[%s2 + $0xd8] sm:$0xff]
        %v341 = vld [vmem:[%s2 + $0xe0] sm:$0xff]
        %v342 = vld [vmem:[%s2 + $0xe8] sm:$0xff]
        %v343 = vld [vmem:[%s2 + $0xf0] sm:$0xff]
        %v344 = vld [vmem:[%s2 + $0xf8] sm:$0xff]
        %v345 = vld [vmem:[%s2 + $0x100] sm:$0xff]
        %v346 = vld [vmem:[%s2 + $0x108] sm:$0xff]
        %v347 = vld [vmem:[%s2 + $0x110] sm:$0xff]
        %v348 = vld [vmem:[%s2 + $0x118] sm:$0xff]
        %v349 = vld [vmem:[%s2 + $0x120] sm:$0xff]
        %v350 = vld [vmem:[%s2 + $0x128] sm:$0xff]
        %v351 = vld [vmem:[%s2 + $0x130] sm:$0xff]
        %v352 = vld [vmem:[%s2 + $0x138] sm:$0xff]
        %vm353 = vcmask 523264
        %v355 = vsel %vm353, %v309, 0
        %v358 = vsel %vm353, %v312, 0
        %360 = vmatpush.msra.mxu0 %v328
        %361 = vmatpush.msra.mxu0 %v327
        %362 = vmatpush.msra.mxu0 %v326
        %363 = vmatpush.msra.mxu0 %v325
        %364 = vmatpush.msra.mxu0 %v324
        %365 = vmatpush.msra.mxu0 %v323
        %366 = vmatpush.msra.mxu0 %v322
        %367 = vmatpush.msra.mxu0 %v321
        %368 = vmatpush.msra.mxu0 %v320
        %369 = vmatpush.msra.mxu0 %v319
        %370 = vmatpush.msra.mxu0 %v318
        %371 = vmatpush.msra.mxu0 %v317
        %372 = vmatpush.msra.mxu0 %v316
        %373 = vmatpush.msra.mxu0 %v315
        %374 = vmatpush.msra.mxu0 %v314
        %375 = vmatpush.msra.mxu0 %v313
        %376 = vmatmul.f32.gmra.mxu0 %v307
        %v377 = vpop.f32.mrf.mxu0
        %v378 = vadd.f32 0.0, %v377
        %379 = vmatmul.f32.gmra.mxu0 %v310
        %v380 = vpop.f32.mrf.mxu0
        %v381 = vadd.f32 0.0, %v380
        %382 = vdwg.mxu0
        %383 = vmatpush.msra.mxu0 %v344
        %384 = vmatpush.msra.mxu0 %v343
        %385 = vmatpush.msra.mxu0 %v342
        %386 = vmatpush.msra.mxu0 %v341
        %387 = vmatpush.msra.mxu0 %v340
        %388 = vmatpush.msra.mxu0 %v339
        %389 = vmatpush.msra.mxu0 %v338
        %390 = vmatpush.msra.mxu0 %v337
        %391 = vmatpush.msra.mxu0 %v336
        %392 = vmatpush.msra.mxu0 %v335
        %393 = vmatpush.msra.mxu0 %v334
        %394 = vmatpush.msra.mxu0 %v333
        %395 = vmatpush.msra.mxu0 %v332
        %396 = vmatpush.msra.mxu0 %v331
        %397 = vmatpush.msra.mxu0 %v330
        %398 = vmatpush.msra.mxu0 %v329
        %399 = vmatmul.f32.gmra.mxu0 %v308
        %v400 = vpop.f32.mrf.mxu0
        %v401 = vadd.f32 %v378, %v400
        %402 = vmatmul.f32.gmra.mxu0 %v311
        %v403 = vpop.f32.mrf.mxu0
        %v404 = vadd.f32 %v381, %v403
        %405 = vdwg.mxu0
        %406 = vmatpush.msra.mxu0 0.0
        %407 = vmatpush.msra.mxu0 0.0
        %408 = vmatpush.msra.mxu0 0.0
        %409 = vmatpush.msra.mxu0 0.0
        %410 = vmatpush.msra.mxu0 0.0
        %411 = vmatpush.msra.mxu0 0.0
        %412 = vmatpush.msra.mxu0 0.0
        %413 = vmatpush.msra.mxu0 0.0
        %414 = vmatpush.msra.mxu0 %v352
        %415 = vmatpush.msra.mxu0 %v351
        %416 = vmatpush.msra.mxu0 %v350
        %417 = vmatpush.msra.mxu0 %v349
        %418 = vmatpush.msra.mxu0 %v348
        %419 = vmatpush.msra.mxu0 %v347
        %420 = vmatpush.msra.mxu0 %v346
        %421 = vmatpush.msra.mxu0 %v345
        %422 = vmatmul.f32.gmra.mxu0 %v355
        %v423 = vpop.f32.mrf.mxu0
        %v424 = vadd.f32 %v401, %v423
        %425 = vmatmul.f32.gmra.mxu0 %v358
        %v426 = vpop.f32.mrf.mxu0
        %v427 = vadd.f32 %v404, %v426
        %428 = vdwg.mxu0
        %v429 = vlaneseq
        %v430 = vshrl.u32 %v429, 7
        %v431 = vadd.s32 %v430, 8
        %vm432 = vcmp.lt.s32.totalorder %v430, 0
        %v433 = vsub.s32 0, %v430
        %v434 = vsel %vm432, %v433, %v430
        %v435 = vshrl.u32 %v434, 4
        %v436 = vand.u32 %v434, 15
        %v437 = vsub.s32 0, %v436
        %v438 = vsel %vm432, %v437, %v436
        %vm439 = vcmp.lt.s32.totalorder %v431, 0
        %v440 = vsub.s32 0, %v431
        %v441 = vsel %vm439, %v440, %v431
        %v442 = vshrl.u32 %v441, 4
        %v443 = vand.u32 %v441, 15
        %v444 = vsub.s32 0, %v443
        %v445 = vsel %vm439, %v444, %v443
        %vm446 = vcmp.ne.s32.totalorder %v438, 0
        %vm447 = vcmp.ne.s32.totalorder %v445, 0
        %vm448 = vcmp.lt.s32.totalorder %v438, 0
        %vm449 = vcmp.lt.s32.totalorder %v445, 0
        %vm450 = vmand %vm448, %vm446
        %vm451 = vmand %vm449, %vm447
        %v452 = vadd.s32 %v438, 16
        %v453 = vadd.s32 %v445, 16
        %v454 = vsel %vm450, %v452, %v438
        %v455 = vsel %vm451, %v453, %v445
        %vm456 = vcmp.eq.s32.totalorder %v454, 0
        %vm457 = vcmp.eq.s32.totalorder %v455, 0
        %v458 = vrot.slane %v424, 7
        %v459 = vrot.slane %v427, 7
        %vm460 = vcmp.lt.s32.totalorder %v430, 1
        %v461 = vsel %vm460, %v458, %v459
        %v462 = vsel %vm460, %v459, %v458
        %v463 = vsel %vm456, 0.0, %v462
        %v464 = vsel %vm457, 0.0, %v461
        %vm465 = vcmp.eq.s32.totalorder %v454, 15
        %vm466 = vcmp.eq.s32.totalorder %v455, 15
        %469 = vrot.lane.b32.xlu0 %v424, 96
        %v470 = vpop.permute.xlu0 %469
        %471 = vrot.lane.b32.xlu0 %v427, 96
        %v472 = vpop.permute.xlu0 %471
        %v475 = vrot.slane %v470, 1
        %v476 = vrot.slane %v472, 1
        %vm477 = vcmp.lt.s32.totalorder %v430, 7
        %v478 = vsel %vm477, %v475, %v476
        %v479 = vsel %vm477, %v476, %v475
        %v480 = vsel %vm465, 0.0, %v478
        %v481 = vsel %vm466, 0.0, %v479
        %484 = vrot.lane.b32.xlu0 %v463, 16
        %v485 = vpop.permute.xlu0 %484
        %486 = vrot.lane.b32.xlu0 %v464, 16
        %v487 = vpop.permute.xlu0 %486
        %v490 = vadd.f32 %v424, %v485
        %v491 = vadd.f32 %v427, %v487
        %494 = vrot.lane.b32.xlu0 %v480, 16
        %v495 = vpop.permute.xlu0 %494
        %496 = vrot.lane.b32.xlu0 %v481, 16
        %v497 = vpop.permute.xlu0 %496
        %v500 = vadd.f32 %v490, %v495
        %v501 = vadd.f32 %v491, %v497
        %v502 = vld [vmem:[%s3] sm:$0xff]
        %v503 = vld [vmem:[%s3 + $0x8] sm:$0xff]
        %506 = vrot.lane.b32.xlu0 %v502, 16
        %v507 = vpop.permute.xlu0 %506
        %508 = vrot.lane.b32.xlu0 %v503, 16
        %v509 = vpop.permute.xlu0 %508
        %v512 = vadd.f32 %v500, %v507
        %v513 = vadd.f32 %v501, %v509
        %v514 = vmax.f32 %v512, 0.0
        %v515 = vmax.f32 %v513, 0.0
        %vm516 = vcmask 261248
        %v517 = vsel %vm516, %v514, -inf
        %v518 = vsel %vm516, %v515, -inf
        %v519 = vmax.f32 %v517, %v518
        %v520 = vrot.slane %v519, 4
        %v521 = vmax.f32 %v519, %v520
        %v522 = vrot.slane %v521, 2
        %v523 = vmax.f32 %v521, %v522
        %v524 = vrot.slane %v523, 1
        %v525 = vmax.f32 %v523, %v524
        %v526 = vsub.f32 %v514, %v525
        %v527 = vsub.f32 %v515, %v525
        %v528 = vmul.f32 %v526, 1.442695
        %v529 = vpow.pop %v528
        %v530 = vmul.f32 %v527, 1.442695
        %v531 = vpow.pop %v530
        %v532 = vsel %vm516, %v529, 0.0
        %v533 = vsel %vm516, %v531, 0.0
        %v534 = vadd.f32 %v532, %v533
        %v535 = vrot.slane %v534, 4
        %v536 = vadd.f32 %v534, %v535
        %v537 = vrot.slane %v536, 2
        %v538 = vadd.f32 %v536, %v537
        %v539 = vrot.slane %v538, 1
        %v540 = vadd.f32 %v538, %v539
        %v541 = vrcp.pop %v540
        %v542 = vmul.f32 %v540, %v541
        %v543 = vsub.f32 1.0, %v542
        %v544 = vmul.f32 %v541, %v543
        %v545 = vadd.f32 %v541, %v544
        %vm546 = vweird.f32 %v540
        %vm547 = vweird.f32 %v541
        %vm548 = vmor %vm546, %vm547
        %v549 = vsel %vm548, %v541, %v545
        %v550 = vand.u32 2147483647, %v540
        %vm551 = vcmp.eq.f32.partialorder %v550, 8.507059e+37
        %v552 = vand.u32 %v540, 2147483648
        %v553 = vor.u32 1.1754944e-38, %v552
        %v554 = vsel %vm551, %v553, %v549
        %v555 = vmul.f32 %v529, %v554
        %v556 = vmul.f32 %v531, %v554
        %559 = vrot.lane.b32.xlu0 %v555, 112
        %v560 = vpop.permute.xlu0 %559
        %561 = vrot.lane.b32.xlu0 %v556, 112
        %v562 = vpop.permute.xlu0 %561
        %vm565 = vcmask 130048
        %566 = vst.msk [vmem:[%s191] sm:$0xff] %vm565, %v560
        %567 = vst.msk [vmem:[%s191 + $0x8] sm:$0xff] %vm565, %v562
        %s568 = sand.u32 %s115, 1
        %s569 = scalar_lea.sflag [#allocation3], %s568
        %s570 = sand.u32 %s115, 1
        %s571 = smul.addr %s570, 16
        %s572 = scalar_lea.vmem [#allocation2], %s571
        // Predicated region
        $region37: #{convnet_forward.1} parent=35 // pred_check
          %p573 = pneg %p125
        $region38: #{convnet_forward.1} parent=35 // pred_check_branch
          %575 = sbr.rel (%p573) target = $region40
        $region39: #{convnet_forward.1} parent=35 // pred_region
          %577 = vsyncadd %s569, 0
          %s578 = smul.addr %s18, 2
          %s579 = smul.addr %s578, 8
          %s580 = scalar_lea.hbm %s4, %s579
          %s581 = sshll.u32 %s572, 4
          %s582 = int_to_ptr.vmem [resolvable:$true] %s581
          %s583 = sshll.u32 %s580, 4
          %s584 = int_to_ptr.hbm [resolvable:$true] %s583
          %589 = dma.vmem_to_hbm [thread:$0]  %s582, 256, %s584, %s569, 128, 128, 8
        $region40: #{convnet_forward.1} parent=35 // pred_fallthru
          _
      $region36: #{convnet_forward.1} parent=5 // pred_fallthru
        _
      %p590 = scmp.le.s32.totalorder 2, %s13
      // Predicated region
      $region41: #{convnet_forward.1} parent=5 // pred_check
        %p591 = pneg %p590
      $region42: #{convnet_forward.1} parent=5 // pred_check_branch
        %593 = sbr.rel (%p591) target = $region44
      $region43: #{convnet_forward.1} parent=5 // pred_region
        %s594 = ssub.s32 %s13, 2
        // Predicated region
        $region45: #{convnet_forward.1} parent=43 // pred_check
          %p595 = pneg %p131
        $region46: #{convnet_forward.1} parent=43 // pred_check_branch
          %597 = sbr.rel (%p595) target = $region48
        $region47: #{convnet_forward.1} parent=43 // pred_region
          %s598 = sand.u32 %s116, 1
          %s599 = scalar_lea.sflag [#allocation3], %s598
          %s600 = sand.u32 %s116, 1
          %s601 = smul.addr %s600, 16
          %s602 = scalar_lea.vmem [#allocation2], %s601
          %604 = dma.done %s599, 256
        $region48: #{convnet_forward.1} parent=43 // pred_fallthru
          _
      $region44: #{convnet_forward.1} parent=5 // pred_fallthru
        _
    $region6: #{convnet_forward.1} parent=1 // loop_footer
      %s17 = sadd.s32 1, %s13
    $region7: #{convnet_forward.1} parent=1 // loop_footer_branch
      %12 = sbr.rel target = $region3
    $region8: #{convnet_forward.1} parent=1 // loop_exit
      _
    %605 = vsyncpa [#allocation3], 1
    %s606 = scalar_lea.sflag [#allocation3], 1
    %607 = vsyncpa %s606, 1

</llo_original>
